<compile_context>
chip_gen: v6e
topology: v6e:2x2x1
jax: 0.10.0
libtpu: 0.0.40
codegen_flags: <defaults>
</compile_context>

<pallas_src>
import jax
import jax.numpy as jnp
from jax import lax
from jax.scipy.linalg import block_diag
from jax.experimental import pallas as pl
from jax.experimental.pallas import tpu as pltpu


def bilstm_nli_kernel(xin_ref, wih_ref, bias_ref, whh_ref,
                      wlin_ref, blin_ref, wfc1_ref, bfc1_ref,
                      wfc2_ref, bfc2_ref, out_ref, gx_ref):
    S, B, _ = xin_ref.shape
    H4 = whh_ref.shape[0]          # 4H : hidden lanes of the 4 fused chains
    H = H4 // 4
    G = 4 * H4                     # 16H: gate lanes of the 4 fused chains

    # ---- (1) input projections for all 4 chains & whole sequence: one big
    #          MXU matmul, bias folded in, done once before the recurrence.
    xin = xin_ref[...].reshape(S * B, -1)
    gx = jnp.dot(xin, wih_ref[...], preferred_element_type=jnp.float32) + bias_ref[...]
    gx_ref[...] = gx.reshape(S, B, G)

    whh = whh_ref[...]             # (4H, 16H) block-diagonal, gate-type-major cols

    h0 = jnp.zeros((B, H4), jnp.float32)
    c0 = jnp.zeros((B, H4), jnp.float32)
    s0 = jnp.zeros((B, H4), jnp.float32)
    # h = o * tanh(c) is strictly inside (-1, 1) => -1 is an exact max-pool floor
    m0 = jnp.full((B, H4), -1.0, jnp.float32)

    # ---- (2) single shared, unrolled time loop over all 4 chains at once.
    def body(t, carry):
        h, c, ssum, smax = carry
        gates = jnp.dot(h, whh, preferred_element_type=jnp.float32) + gx_ref[t]
        sig = jax.nn.sigmoid(gates[:, :3 * H4])      # i|f|o for all chains
        g = jnp.tanh(gates[:, 3 * H4:])              # g for all chains
        i = sig[:, :H4]
        f = sig[:, H4:2 * H4]
        o = sig[:, 2 * H4:3 * H4]
        c_new = f * c + i * g
        h_new = o * jnp.tanh(c_new)
        return h_new, c_new, ssum + h_new, jnp.maximum(smax, h_new)

    _, _, ssum, smax = lax.fori_loop(0, S, body, (h0, c0, s0, m0), unroll=True)

    avg = ssum * (1.0 / S)
    H2 = 2 * H
    # conc = [avg1, max1 | avg2, max2]  (B, 8H); fused per-branch Linear + ReLU
    conc = jnp.concatenate(
        [avg[:, :H2], smax[:, :H2], avg[:, H2:], smax[:, H2:]], axis=1)
    feat = jnp.maximum(
        jnp.dot(conc, wlin_ref[...], preferred_element_type=jnp.float32)
        + blin_ref[...], 0.0)                         # (B, 2H) = [out1 | out2]
    out1 = feat[:, :H]
    out2 = feat[:, H:]

    # NLI head: one lane-dense (B, 4H=128) concat -> fc1 -> ReLU -> fc2
    x = jnp.concatenate([out1, out2, out1 * out2, out1 - out2], axis=1)
    hid = jnp.maximum(
        jnp.dot(x, wfc1_ref[...], preferred_element_type=jnp.float32)
        + bfc1_ref[...], 0.0)
    out_ref[...] = (jnp.dot(hid, wfc2_ref[...], preferred_element_type=jnp.float32)
                    + bfc2_ref[...])


_GATE_PERM = (0, 1, 3, 2)   # PyTorch gate rows [i, f, g, o] -> new order [i, f, o, g]


def _pack_recurrent(chains, H):
    """Pack 4 LSTM chains into gate-type-major block-diagonal weights/bias."""
    wih_cols, whh_cols, b_cols = [], [], []
    for gp in _GATE_PERM:
        wih_cols.append(block_diag(
            *[c["w_ih"][gp * H:(gp + 1) * H, :].T for c in chains]))   # (4E, 4H)
        whh_cols.append(block_diag(
            *[c["w_hh"][gp * H:(gp + 1) * H, :].T for c in chains]))   # (4H, 4H)
        b_cols.append(jnp.concatenate(
            [c["b"][gp * H:(gp + 1) * H] for c in chains]))
    wih_bd = jnp.concatenate(wih_cols, axis=1)        # (4E, 16H)
    whh_bd = jnp.concatenate(whh_cols, axis=1)        # (4H, 16H)
    bias = jnp.concatenate(b_cols).reshape(1, -1)     # (1, 16H)
    return wih_bd, whh_bd, bias


def bilstm_nli_forward(x1_tokens, x2_tokens, params):
    emb = params["embedding_matrix"].astype(jnp.float32)    # (V, E)
    B, S = x1_tokens.shape
    H = params["net1"]["w_hh_f"].shape[1]
    O = params["w_fc2"].shape[0]

    B_pad = max(8, ((B + 7) // 8) * 8)        # fill all 8 sublanes of each vreg
    O_pad = max(128, ((O + 127) // 128) * 128)  # lane-dense output store

    # --- glue: embedding gather, time-major, batch padding, time reversal
    def embed(tok):
        e = jnp.transpose(emb[tok], (1, 0, 2))               # (S, B, E)
        if B_pad != B:
            e = jnp.pad(e, ((0, 0), (0, B_pad - B), (0, 0)))
        return e

    e1, e2 = embed(x1_tokens), embed(x2_tokens)
    # chain order: [net1-fwd, net1-bwd, net2-fwd, net2-bwd]
    xin = jnp.concatenate([e1, e1[::-1], e2, e2[::-1]], axis=-1)   # (S, Bp, 4E)

    chains = []
    for net in ("net1", "net2"):
        p = params[net]
        chains.append({"w_ih": p["w_ih_f"], "w_hh": p["w_hh_f"],
                       "b": p["b_ih_f"] + p["b_hh_f"]})
        chains.append({"w_ih": p["w_ih_b"], "w_hh": p["w_hh_b"],
                       "b": p["b_ih_b"] + p["b_hh_b"]})
    wih_bd, whh_bd, bias_all = _pack_recurrent(chains, H)

    # fused per-branch Linear(4H -> H) for both branches: block-diag (8H, 2H)
    wlin_bd = block_diag(params["net1"]["w_lin"].T, params["net2"]["w_lin"].T)
    blin = jnp.concatenate(
        [params["net1"]["b_lin"], params["net2"]["b_lin"]]).reshape(1, -1)

    wfc1_t = params["w_fc1"].T                                 # (4H, H)
    bfc1 = params["b_fc1"].reshape(1, -1)
    wfc2_t = jnp.zeros((H, O_pad), jnp.float32).at[:, :O].set(params["w_fc2"].T)
    bfc2 = jnp.zeros((1, O_pad), jnp.float32).at[:, :O].set(
        params["b_fc2"].reshape(1, -1))

    vmem = pl.BlockSpec(memory_space=pltpu.MemorySpace.VMEM)
    out_pad = pl.pallas_call(
        bilstm_nli_kernel,
        out_shape=jax.ShapeDtypeStruct((B_pad, O_pad), jnp.float32),
        in_specs=[vmem] * 10,
        out_specs=vmem,
        scratch_shapes=[pltpu.VMEM((S, B_pad, 16 * H), jnp.float32)],
        compiler_params=pltpu.CompilerParams(vmem_limit_bytes=32 * 1024 * 1024),
        # TODO(synk): at production S/B, keep xin in HBM (memory_space=pl.ANY)
        # and stream time chunks via make_async_copy; on v7x also split the two
        # branches across the 2 TensorCores (core_map / parallel grid axis).
    )(xin, wih_bd, bias_all, whh_bd, wlin_bd, blin, wfc1_t, bfc1, wfc2_t, bfc2)
    return out_pad[:B, :O]


def init_params(key, vocab_size, embedding_dim, hidden_size, output_dim):
    keys = list(jax.random.split(key, 64))
    it = iter(keys)

    def u(shape, scale):
        return jax.random.uniform(next(it), shape, jnp.float32, -scale, scale)

    H, E = hidden_size, embedding_dim
    k_lstm = 1.0 / (H ** 0.5)
    k_lin4 = 1.0 / ((4 * H) ** 0.5)
    k_linH = 1.0 / (H ** 0.5)

    def lstm_branch():
        return {
            "w_ih_f": u((4 * H, E), k_lstm), "w_hh_f": u((4 * H, H), k_lstm),
            "b_ih_f": u((4 * H,), k_lstm), "b_hh_f": u((4 * H,), k_lstm),
            "w_ih_b": u((4 * H, E), k_lstm), "w_hh_b": u((4 * H, H), k_lstm),
            "b_ih_b": u((4 * H,), k_lstm), "b_hh_b": u((4 * H,), k_lstm),
            "w_lin": u((H, 4 * H), k_lin4), "b_lin": u((H,), k_lin4),
        }

    return {
        # frozen embedding_matrix (shared by both sub-nets, as in the module)
        "embedding_matrix": u((vocab_size, E), 0.5),
        "net1": lstm_branch(),
        "net2": lstm_branch(),
        "w_fc1": u((H, 4 * H), k_lin4), "b_fc1": u((H,), k_lin4),
        "w_fc2": u((output_dim, H), k_linH), "b_fc2": u((output_dim,), k_linH),
    }


if __name__ == "__main__":
    vocab_size, embedding_dim, hidden_size, output_dim = 32, 16, 32, 3
    batch, seq = 2, 8

    key = jax.random.PRNGKey(0)
    k_params, k_x1, k_x2 = jax.random.split(key, 3)
    params = init_params(k_params, vocab_size, embedding_dim, hidden_size, output_dim)

    x1 = jax.random.randint(k_x1, (batch, seq), 0, vocab_size, jnp.int32)
    x2 = jax.random.randint(k_x2, (batch, seq), 0, vocab_size, jnp.int32)

    fwd = jax.jit(bilstm_nli_forward)
    out = jax.block_until_ready(fwd(x1, x2, params))
    assert out.shape == (batch, output_dim)
    assert bool(jnp.all(jnp.isfinite(out)))
    print("KERNEL_OK")
</pallas_src>

<mosaic_0001>
module attributes {stable_mosaic.version = 11 : i64} {
  func.func @bilstm_nli_kernel(%arg0: memref<8x8x64xf32, #tpu.memory_space<vmem>>, %arg1: memref<64x512xf32, #tpu.memory_space<vmem>>, %arg2: memref<1x512xf32, #tpu.memory_space<vmem>>, %arg3: memref<128x512xf32, #tpu.memory_space<vmem>>, %arg4: memref<256x64xf32, #tpu.memory_space<vmem>>, %arg5: memref<1x64xf32, #tpu.memory_space<vmem>>, %arg6: memref<128x32xf32, #tpu.memory_space<vmem>>, %arg7: memref<1x32xf32, #tpu.memory_space<vmem>>, %arg8: memref<32x128xf32, #tpu.memory_space<vmem>>, %arg9: memref<1x128xf32, #tpu.memory_space<vmem>>, %arg10: memref<8x128xf32, #tpu.memory_space<vmem>>, %arg11: memref<8x8x512xf32, #tpu.memory_space<vmem>>) attributes {dimension_semantics = [], scalar_prefetch = 0 : i64, scratch_operands = 1 : i64, tpu.core_type = #tpu.core_type<tc>} {
    %c0 = arith.constant 0 : index
    %c0_0 = arith.constant 0 : index
    %c0_1 = arith.constant 0 : index
    %0 = vector.load %arg0[%c0, %c0_0, %c0_1] : memref<8x8x64xf32, #tpu.memory_space<vmem>>, vector<8x8x64xf32>
    %1 = vector.shape_cast %0 : vector<8x8x64xf32> to vector<64x64xf32>
    %c0_2 = arith.constant 0 : index
    %c0_3 = arith.constant 0 : index
    %2 = vector.load %arg1[%c0_2, %c0_3] : memref<64x512xf32, #tpu.memory_space<vmem>>, vector<64x512xf32>
    %cst = arith.constant dense<0.000000e+00> : vector<64x512xf32>
    %3 = tpu.matmul %1, %2, %cst {dimension_numbers = #tpu.dot_dimension_numbers<[1], [0], [0], [1], [0, 0, 1, 1], [], []>} : vector<64x64xf32>, vector<64x512xf32>, vector<64x512xf32> -> vector<64x512xf32>
    %c0_4 = arith.constant 0 : index
    %c0_5 = arith.constant 0 : index
    %4 = vector.load %arg2[%c0_4, %c0_5] : memref<1x512xf32, #tpu.memory_space<vmem>>, vector<1x512xf32>
    %5 = vector.broadcast %4 : vector<1x512xf32> to vector<64x512xf32>
    %6 = arith.addf %3, %5 : vector<64x512xf32>
    %7 = vector.shape_cast %6 : vector<64x512xf32> to vector<8x8x512xf32>
    %c0_6 = arith.constant 0 : index
    %c0_7 = arith.constant 0 : index
    %c0_8 = arith.constant 0 : index
    %8 = vector.load %arg11[%c0_6, %c0_7, %c0_8] : memref<8x8x512xf32, #tpu.memory_space<vmem>>, vector<8x8x512xf32>
    tpu.vector_store %arg11[%c0_6, %c0_7, %c0_8], %7 {strides = array<i32>} : memref<8x8x512xf32, #tpu.memory_space<vmem>>, vector<8x8x512xf32>,
    %c0_9 = arith.constant 0 : index
    %c0_10 = arith.constant 0 : index
    %9 = vector.load %arg3[%c0_9, %c0_10] : memref<128x512xf32, #tpu.memory_space<vmem>>, vector<128x512xf32>
    %cst_11 = arith.constant 0.000000e+00 : f32
    %10 = vector.broadcast %cst_11 : f32 to vector<8x128xf32>
    %cst_12 = arith.constant 0.000000e+00 : f32
    %11 = vector.broadcast %cst_12 : f32 to vector<8x128xf32>
    %cst_13 = arith.constant 0.000000e+00 : f32
    %12 = vector.broadcast %cst_13 : f32 to vector<8x128xf32>
    %cst_14 = arith.constant -1.000000e+00 : f32
    %13 = vector.broadcast %cst_14 : f32 to vector<8x128xf32>
    %c0_i32 = arith.constant 0 : i32
    %cst_15 = arith.constant dense<0.000000e+00> : vector<8x512xf32>
    %14 = tpu.matmul %10, %9, %cst_15 {dimension_numbers = #tpu.dot_dimension_numbers<[1], [0], [0], [1], [0, 0, 1, 1], [], []>} : vector<8x128xf32>, vector<128x512xf32>, vector<8x512xf32> -> vector<8x512xf32>
    %15 = arith.index_cast %c0_i32 : i32 to index
    %c0_16 = arith.constant 0 : index
    %c0_17 = arith.constant 0 : index
    %16 = vector.load %arg11[%15, %c0_16, %c0_17] : memref<8x8x512xf32, #tpu.memory_space<vmem>>, vector<1x8x512xf32>
    %17 = vector.shape_cast %16 : vector<1x8x512xf32> to vector<8x512xf32>
    %18 = arith.addf %14, %17 : vector<8x512xf32>
    %19 = vector.extract_strided_slice %18 {offsets = [0, 0], sizes = [8, 384], strides = [1, 1]} : vector<8x512xf32> to vector<8x384xf32>
    %20 = arith.negf %19 : vector<8x384xf32>
    %21 = math.exp %20 : vector<8x384xf32>
    %cst_18 = arith.constant 1.000000e+00 : f32
    %22 = vector.broadcast %cst_18 : f32 to vector<8x384xf32>
    %23 = arith.addf %22, %21 : vector<8x384xf32>
    %24 = arith.divf %22, %23 : vector<8x384xf32>
    %25 = vector.extract_strided_slice %18 {offsets = [0, 384], sizes = [8, 128], strides = [1, 1]} : vector<8x512xf32> to vector<8x128xf32>
    %26 = math.tanh %25 : vector<8x128xf32>
    %27 = vector.extract_strided_slice %24 {offsets = [0, 0], sizes = [8, 128], strides = [1, 1]} : vector<8x384xf32> to vector<8x128xf32>
    %28 = vector.extract_strided_slice %24 {offsets = [0, 128], sizes = [8, 128], strides = [1, 1]} : vector<8x384xf32> to vector<8x128xf32>
    %29 = vector.extract_strided_slice %24 {offsets = [0, 256], sizes = [8, 128], strides = [1, 1]} : vector<8x384xf32> to vector<8x128xf32>
    %30 = arith.mulf %28, %11 : vector<8x128xf32>
    %31 = arith.mulf %27, %26 : vector<8x128xf32>
    %32 = arith.addf %30, %31 : vector<8x128xf32>
    %33 = math.tanh %32 : vector<8x128xf32>
    %34 = arith.mulf %29, %33 : vector<8x128xf32>
    %35 = arith.addf %12, %34 : vector<8x128xf32>
    %36 = arith.maximumf %13, %34 : vector<8x128xf32>
    %c1_i32 = arith.constant 1 : i32
    %cst_19 = arith.constant dense<0.000000e+00> : vector<8x512xf32>
    %37 = tpu.matmul %34, %9, %cst_19 {dimension_numbers = #tpu.dot_dimension_numbers<[1], [0], [0], [1], [0, 0, 1, 1], [], []>} : vector<8x128xf32>, vector<128x512xf32>, vector<8x512xf32> -> vector<8x512xf32>
    %38 = arith.index_cast %c1_i32 : i32 to index
    %c0_20 = arith.constant 0 : index
    %c0_21 = arith.constant 0 : index
    %39 = vector.load %arg11[%38, %c0_20, %c0_21] : memref<8x8x512xf32, #tpu.memory_space<vmem>>, vector<1x8x512xf32>
    %40 = vector.shape_cast %39 : vector<1x8x512xf32> to vector<8x512xf32>
    %41 = arith.addf %37, %40 : vector<8x512xf32>
    %42 = vector.extract_strided_slice %41 {offsets = [0, 0], sizes = [8, 384], strides = [1, 1]} : vector<8x512xf32> to vector<8x384xf32>
    %43 = arith.negf %42 : vector<8x384xf32>
    %44 = math.exp %43 : vector<8x384xf32>
    %cst_22 = arith.constant 1.000000e+00 : f32
    %45 = vector.broadcast %cst_22 : f32 to vector<8x384xf32>
    %46 = arith.addf %45, %44 : vector<8x384xf32>
    %47 = arith.divf %45, %46 : vector<8x384xf32>
    %48 = vector.extract_strided_slice %41 {offsets = [0, 384], sizes = [8, 128], strides = [1, 1]} : vector<8x512xf32> to vector<8x128xf32>
    %49 = math.tanh %48 : vector<8x128xf32>
    %50 = vector.extract_strided_slice %47 {offsets = [0, 0], sizes = [8, 128], strides = [1, 1]} : vector<8x384xf32> to vector<8x128xf32>
    %51 = vector.extract_strided_slice %47 {offsets = [0, 128], sizes = [8, 128], strides = [1, 1]} : vector<8x384xf32> to vector<8x128xf32>
    %52 = vector.extract_strided_slice %47 {offsets = [0, 256], sizes = [8, 128], strides = [1, 1]} : vector<8x384xf32> to vector<8x128xf32>
    %53 = arith.mulf %51, %32 : vector<8x128xf32>
    %54 = arith.mulf %50, %49 : vector<8x128xf32>
    %55 = arith.addf %53, %54 : vector<8x128xf32>
    %56 = math.tanh %55 : vector<8x128xf32>
    %57 = arith.mulf %52, %56 : vector<8x128xf32>
    %58 = arith.addf %35, %57 : vector<8x128xf32>
    %59 = arith.maximumf %36, %57 : vector<8x128xf32>
    %c2_i32 = arith.constant 2 : i32
    %cst_23 = arith.constant dense<0.000000e+00> : vector<8x512xf32>
    %60 = tpu.matmul %57, %9, %cst_23 {dimension_numbers = #tpu.dot_dimension_numbers<[1], [0], [0], [1], [0, 0, 1, 1], [], []>} : vector<8x128xf32>, vector<128x512xf32>, vector<8x512xf32> -> vector<8x512xf32>
    %61 = arith.index_cast %c2_i32 : i32 to index
    %c0_24 = arith.constant 0 : index
    %c0_25 = arith.constant 0 : index
    %62 = vector.load %arg11[%61, %c0_24, %c0_25] : memref<8x8x512xf32, #tpu.memory_space<vmem>>, vector<1x8x512xf32>
    %63 = vector.shape_cast %62 : vector<1x8x512xf32> to vector<8x512xf32>
    %64 = arith.addf %60, %63 : vector<8x512xf32>
    %65 = vector.extract_strided_slice %64 {offsets = [0, 0], sizes = [8, 384], strides = [1, 1]} : vector<8x512xf32> to vector<8x384xf32>
    %66 = arith.negf %65 : vector<8x384xf32>
    %67 = math.exp %66 : vector<8x384xf32>
    %cst_26 = arith.constant 1.000000e+00 : f32
    %68 = vector.broadcast %cst_26 : f32 to vector<8x384xf32>
    %69 = arith.addf %68, %67 : vector<8x384xf32>
    %70 = arith.divf %68, %69 : vector<8x384xf32>
    %71 = vector.extract_strided_slice %64 {offsets = [0, 384], sizes = [8, 128], strides = [1, 1]} : vector<8x512xf32> to vector<8x128xf32>
    %72 = math.tanh %71 : vector<8x128xf32>
    %73 = vector.extract_strided_slice %70 {offsets = [0, 0], sizes = [8, 128], strides = [1, 1]} : vector<8x384xf32> to vector<8x128xf32>
    %74 = vector.extract_strided_slice %70 {offsets = [0, 128], sizes = [8, 128], strides = [1, 1]} : vector<8x384xf32> to vector<8x128xf32>
    %75 = vector.extract_strided_slice %70 {offsets = [0, 256], sizes = [8, 128], strides = [1, 1]} : vector<8x384xf32> to vector<8x128xf32>
    %76 = arith.mulf %74, %55 : vector<8x128xf32>
    %77 = arith.mulf %73, %72 : vector<8x128xf32>
    %78 = arith.addf %76, %77 : vector<8x128xf32>
    %79 = math.tanh %78 : vector<8x128xf32>
    %80 = arith.mulf %75, %79 : vector<8x128xf32>
    %81 = arith.addf %58, %80 : vector<8x128xf32>
    %82 = arith.maximumf %59, %80 : vector<8x128xf32>
    %c3_i32 = arith.constant 3 : i32
    %cst_27 = arith.constant dense<0.000000e+00> : vector<8x512xf32>
    %83 = tpu.matmul %80, %9, %cst_27 {dimension_numbers = #tpu.dot_dimension_numbers<[1], [0], [0], [1], [0, 0, 1, 1], [], []>} : vector<8x128xf32>, vector<128x512xf32>, vector<8x512xf32> -> vector<8x512xf32>
    %84 = arith.index_cast %c3_i32 : i32 to index
    %c0_28 = arith.constant 0 : index
    %c0_29 = arith.constant 0 : index
    %85 = vector.load %arg11[%84, %c0_28, %c0_29] : memref<8x8x512xf32, #tpu.memory_space<vmem>>, vector<1x8x512xf32>
    %86 = vector.shape_cast %85 : vector<1x8x512xf32> to vector<8x512xf32>
    %87 = arith.addf %83, %86 : vector<8x512xf32>
    %88 = vector.extract_strided_slice %87 {offsets = [0, 0], sizes = [8, 384], strides = [1, 1]} : vector<8x512xf32> to vector<8x384xf32>
    %89 = arith.negf %88 : vector<8x384xf32>
    %90 = math.exp %89 : vector<8x384xf32>
    %cst_30 = arith.constant 1.000000e+00 : f32
    %91 = vector.broadcast %cst_30 : f32 to vector<8x384xf32>
    %92 = arith.addf %91, %90 : vector<8x384xf32>
    %93 = arith.divf %91, %92 : vector<8x384xf32>
    %94 = vector.extract_strided_slice %87 {offsets = [0, 384], sizes = [8, 128], strides = [1, 1]} : vector<8x512xf32> to vector<8x128xf32>
    %95 = math.tanh %94 : vector<8x128xf32>
    %96 = vector.extract_strided_slice %93 {offsets = [0, 0], sizes = [8, 128], strides = [1, 1]} : vector<8x384xf32> to vector<8x128xf32>
    %97 = vector.extract_strided_slice %93 {offsets = [0, 128], sizes = [8, 128], strides = [1, 1]} : vector<8x384xf32> to vector<8x128xf32>
    %98 = vector.extract_strided_slice %93 {offsets = [0, 256], sizes = [8, 128], strides = [1, 1]} : vector<8x384xf32> to vector<8x128xf32>
    %99 = arith.mulf %97, %78 : vector<8x128xf32>
    %100 = arith.mulf %96, %95 : vector<8x128xf32>
    %101 = arith.addf %99, %100 : vector<8x128xf32>
    %102 = math.tanh %101 : vector<8x128xf32>
    %103 = arith.mulf %98, %102 : vector<8x128xf32>
    %104 = arith.addf %81, %103 : vector<8x128xf32>
    %105 = arith.maximumf %82, %103 : vector<8x128xf32>
    %c4_i32 = arith.constant 4 : i32
    %cst_31 = arith.constant dense<0.000000e+00> : vector<8x512xf32>
    %106 = tpu.matmul %103, %9, %cst_31 {dimension_numbers = #tpu.dot_dimension_numbers<[1], [0], [0], [1], [0, 0, 1, 1], [], []>} : vector<8x128xf32>, vector<128x512xf32>, vector<8x512xf32> -> vector<8x512xf32>
    %107 = arith.index_cast %c4_i32 : i32 to index
    %c0_32 = arith.constant 0 : index
    %c0_33 = arith.constant 0 : index
    %108 = vector.load %arg11[%107, %c0_32, %c0_33] : memref<8x8x512xf32, #tpu.memory_space<vmem>>, vector<1x8x512xf32>
    %109 = vector.shape_cast %108 : vector<1x8x512xf32> to vector<8x512xf32>
    %110 = arith.addf %106, %109 : vector<8x512xf32>
    %111 = vector.extract_strided_slice %110 {offsets = [0, 0], sizes = [8, 384], strides = [1, 1]} : vector<8x512xf32> to vector<8x384xf32>
    %112 = arith.negf %111 : vector<8x384xf32>
    %113 = math.exp %112 : vector<8x384xf32>
    %cst_34 = arith.constant 1.000000e+00 : f32
    %114 = vector.broadcast %cst_34 : f32 to vector<8x384xf32>
    %115 = arith.addf %114, %113 : vector<8x384xf32>
    %116 = arith.divf %114, %115 : vector<8x384xf32>
    %117 = vector.extract_strided_slice %110 {offsets = [0, 384], sizes = [8, 128], strides = [1, 1]} : vector<8x512xf32> to vector<8x128xf32>
    %118 = math.tanh %117 : vector<8x128xf32>
    %119 = vector.extract_strided_slice %116 {offsets = [0, 0], sizes = [8, 128], strides = [1, 1]} : vector<8x384xf32> to vector<8x128xf32>
    %120 = vector.extract_strided_slice %116 {offsets = [0, 128], sizes = [8, 128], strides = [1, 1]} : vector<8x384xf32> to vector<8x128xf32>
    %121 = vector.extract_strided_slice %116 {offsets = [0, 256], sizes = [8, 128], strides = [1, 1]} : vector<8x384xf32> to vector<8x128xf32>
    %122 = arith.mulf %120, %101 : vector<8x128xf32>
    %123 = arith.mulf %119, %118 : vector<8x128xf32>
    %124 = arith.addf %122, %123 : vector<8x128xf32>
    %125 = math.tanh %124 : vector<8x128xf32>
    %126 = arith.mulf %121, %125 : vector<8x128xf32>
    %127 = arith.addf %104, %126 : vector<8x128xf32>
    %128 = arith.maximumf %105, %126 : vector<8x128xf32>
    %c5_i32 = arith.constant 5 : i32
    %cst_35 = arith.constant dense<0.000000e+00> : vector<8x512xf32>
    %129 = tpu.matmul %126, %9, %cst_35 {dimension_numbers = #tpu.dot_dimension_numbers<[1], [0], [0], [1], [0, 0, 1, 1], [], []>} : vector<8x128xf32>, vector<128x512xf32>, vector<8x512xf32> -> vector<8x512xf32>
    %130 = arith.index_cast %c5_i32 : i32 to index
    %c0_36 = arith.constant 0 : index
    %c0_37 = arith.constant 0 : index
    %131 = vector.load %arg11[%130, %c0_36, %c0_37] : memref<8x8x512xf32, #tpu.memory_space<vmem>>, vector<1x8x512xf32>
    %132 = vector.shape_cast %131 : vector<1x8x512xf32> to vector<8x512xf32>
    %133 = arith.addf %129, %132 : vector<8x512xf32>
    %134 = vector.extract_strided_slice %133 {offsets = [0, 0], sizes = [8, 384], strides = [1, 1]} : vector<8x512xf32> to vector<8x384xf32>
    %135 = arith.negf %134 : vector<8x384xf32>
    %136 = math.exp %135 : vector<8x384xf32>
    %cst_38 = arith.constant 1.000000e+00 : f32
    %137 = vector.broadcast %cst_38 : f32 to vector<8x384xf32>
    %138 = arith.addf %137, %136 : vector<8x384xf32>
    %139 = arith.divf %137, %138 : vector<8x384xf32>
    %140 = vector.extract_strided_slice %133 {offsets = [0, 384], sizes = [8, 128], strides = [1, 1]} : vector<8x512xf32> to vector<8x128xf32>
    %141 = math.tanh %140 : vector<8x128xf32>
    %142 = vector.extract_strided_slice %139 {offsets = [0, 0], sizes = [8, 128], strides = [1, 1]} : vector<8x384xf32> to vector<8x128xf32>
    %143 = vector.extract_strided_slice %139 {offsets = [0, 128], sizes = [8, 128], strides = [1, 1]} : vector<8x384xf32> to vector<8x128xf32>
    %144 = vector.extract_strided_slice %139 {offsets = [0, 256], sizes = [8, 128], strides = [1, 1]} : vector<8x384xf32> to vector<8x128xf32>
    %145 = arith.mulf %143, %124 : vector<8x128xf32>
    %146 = arith.mulf %142, %141 : vector<8x128xf32>
    %147 = arith.addf %145, %146 : vector<8x128xf32>
    %148 = math.tanh %147 : vector<8x128xf32>
    %149 = arith.mulf %144, %148 : vector<8x128xf32>
    %150 = arith.addf %127, %149 : vector<8x128xf32>
    %151 = arith.maximumf %128, %149 : vector<8x128xf32>
    %c6_i32 = arith.constant 6 : i32
    %cst_39 = arith.constant dense<0.000000e+00> : vector<8x512xf32>
    %152 = tpu.matmul %149, %9, %cst_39 {dimension_numbers = #tpu.dot_dimension_numbers<[1], [0], [0], [1], [0, 0, 1, 1], [], []>} : vector<8x128xf32>, vector<128x512xf32>, vector<8x512xf32> -> vector<8x512xf32>
    %153 = arith.index_cast %c6_i32 : i32 to index
    %c0_40 = arith.constant 0 : index
    %c0_41 = arith.constant 0 : index
    %154 = vector.load %arg11[%153, %c0_40, %c0_41] : memref<8x8x512xf32, #tpu.memory_space<vmem>>, vector<1x8x512xf32>
    %155 = vector.shape_cast %154 : vector<1x8x512xf32> to vector<8x512xf32>
    %156 = arith.addf %152, %155 : vector<8x512xf32>
    %157 = vector.extract_strided_slice %156 {offsets = [0, 0], sizes = [8, 384], strides = [1, 1]} : vector<8x512xf32> to vector<8x384xf32>
    %158 = arith.negf %157 : vector<8x384xf32>
    %159 = math.exp %158 : vector<8x384xf32>
    %cst_42 = arith.constant 1.000000e+00 : f32
    %160 = vector.broadcast %cst_42 : f32 to vector<8x384xf32>
    %161 = arith.addf %160, %159 : vector<8x384xf32>
    %162 = arith.divf %160, %161 : vector<8x384xf32>
    %163 = vector.extract_strided_slice %156 {offsets = [0, 384], sizes = [8, 128], strides = [1, 1]} : vector<8x512xf32> to vector<8x128xf32>
    %164 = math.tanh %163 : vector<8x128xf32>
    %165 = vector.extract_strided_slice %162 {offsets = [0, 0], sizes = [8, 128], strides = [1, 1]} : vector<8x384xf32> to vector<8x128xf32>
    %166 = vector.extract_strided_slice %162 {offsets = [0, 128], sizes = [8, 128], strides = [1, 1]} : vector<8x384xf32> to vector<8x128xf32>
    %167 = vector.extract_strided_slice %162 {offsets = [0, 256], sizes = [8, 128], strides = [1, 1]} : vector<8x384xf32> to vector<8x128xf32>
    %168 = arith.mulf %166, %147 : vector<8x128xf32>
    %169 = arith.mulf %165, %164 : vector<8x128xf32>
    %170 = arith.addf %168, %169 : vector<8x128xf32>
    %171 = math.tanh %170 : vector<8x128xf32>
    %172 = arith.mulf %167, %171 : vector<8x128xf32>
    %173 = arith.addf %150, %172 : vector<8x128xf32>
    %174 = arith.maximumf %151, %172 : vector<8x128xf32>
    %c7_i32 = arith.constant 7 : i32
    %cst_43 = arith.constant dense<0.000000e+00> : vector<8x512xf32>
    %175 = tpu.matmul %172, %9, %cst_43 {dimension_numbers = #tpu.dot_dimension_numbers<[1], [0], [0], [1], [0, 0, 1, 1], [], []>} : vector<8x128xf32>, vector<128x512xf32>, vector<8x512xf32> -> vector<8x512xf32>
    %176 = arith.index_cast %c7_i32 : i32 to index
    %c0_44 = arith.constant 0 : index
    %c0_45 = arith.constant 0 : index
    %177 = vector.load %arg11[%176, %c0_44, %c0_45] : memref<8x8x512xf32, #tpu.memory_space<vmem>>, vector<1x8x512xf32>
    %178 = vector.shape_cast %177 : vector<1x8x512xf32> to vector<8x512xf32>
    %179 = arith.addf %175, %178 : vector<8x512xf32>
    %180 = vector.extract_strided_slice %179 {offsets = [0, 0], sizes = [8, 384], strides = [1, 1]} : vector<8x512xf32> to vector<8x384xf32>
    %181 = arith.negf %180 : vector<8x384xf32>
    %182 = math.exp %181 : vector<8x384xf32>
    %cst_46 = arith.constant 1.000000e+00 : f32
    %183 = vector.broadcast %cst_46 : f32 to vector<8x384xf32>
    %184 = arith.addf %183, %182 : vector<8x384xf32>
    %185 = arith.divf %183, %184 : vector<8x384xf32>
    %186 = vector.extract_strided_slice %179 {offsets = [0, 384], sizes = [8, 128], strides = [1, 1]} : vector<8x512xf32> to vector<8x128xf32>
    %187 = math.tanh %186 : vector<8x128xf32>
    %188 = vector.extract_strided_slice %185 {offsets = [0, 0], sizes = [8, 128], strides = [1, 1]} : vector<8x384xf32> to vector<8x128xf32>
    %189 = vector.extract_strided_slice %185 {offsets = [0, 128], sizes = [8, 128], strides = [1, 1]} : vector<8x384xf32> to vector<8x128xf32>
    %190 = vector.extract_strided_slice %185 {offsets = [0, 256], sizes = [8, 128], strides = [1, 1]} : vector<8x384xf32> to vector<8x128xf32>
    %191 = arith.mulf %189, %170 : vector<8x128xf32>
    %192 = arith.mulf %188, %187 : vector<8x128xf32>
    %193 = arith.addf %191, %192 : vector<8x128xf32>
    %194 = math.tanh %193 : vector<8x128xf32>
    %195 = arith.mulf %190, %194 : vector<8x128xf32>
    %196 = arith.addf %173, %195 : vector<8x128xf32>
    %197 = arith.maximumf %174, %195 : vector<8x128xf32>
    %c8_i32 = arith.constant 8 : i32
    %cst_47 = arith.constant 1.250000e-01 : f32
    %198 = vector.broadcast %cst_47 : f32 to vector<8x128xf32>
    %199 = arith.mulf %196, %198 : vector<8x128xf32>
    %200 = vector.extract_strided_slice %199 {offsets = [0, 0], sizes = [8, 64], strides = [1, 1]} : vector<8x128xf32> to vector<8x64xf32>
    %201 = vector.extract_strided_slice %197 {offsets = [0, 0], sizes = [8, 64], strides = [1, 1]} : vector<8x128xf32> to vector<8x64xf32>
    %202 = vector.extract_strided_slice %199 {offsets = [0, 64], sizes = [8, 64], strides = [1, 1]} : vector<8x128xf32> to vector<8x64xf32>
    %203 = vector.extract_strided_slice %197 {offsets = [0, 64], sizes = [8, 64], strides = [1, 1]} : vector<8x128xf32> to vector<8x64xf32>
    %204 = tpu.concatenate %200, %201, %202, %203 in 1 : vector<8x64xf32>, vector<8x64xf32>, vector<8x64xf32>, vector<8x64xf32> -> vector<8x256xf32>
    %c0_48 = arith.constant 0 : index
    %c0_49 = arith.constant 0 : index
    %205 = vector.load %arg4[%c0_48, %c0_49] : memref<256x64xf32, #tpu.memory_space<vmem>>, vector<256x64xf32>
    %cst_50 = arith.constant dense<0.000000e+00> : vector<8x64xf32>
    %206 = tpu.matmul %204, %205, %cst_50 {dimension_numbers = #tpu.dot_dimension_numbers<[1], [0], [0], [1], [0, 0, 1, 1], [], []>} : vector<8x256xf32>, vector<256x64xf32>, vector<8x64xf32> -> vector<8x64xf32>
    %c0_51 = arith.constant 0 : index
    %c0_52 = arith.constant 0 : index
    %207 = vector.load %arg5[%c0_51, %c0_52] : memref<1x64xf32, #tpu.memory_space<vmem>>, vector<1x64xf32>
    %208 = vector.broadcast %207 : vector<1x64xf32> to vector<8x64xf32>
    %209 = arith.addf %206, %208 : vector<8x64xf32>
    %cst_53 = arith.constant 0.000000e+00 : f32
    %210 = vector.broadcast %cst_53 : f32 to vector<8x64xf32>
    %211 = arith.maximumf %209, %210 : vector<8x64xf32>
    %212 = vector.extract_strided_slice %211 {offsets = [0, 0], sizes = [8, 32], strides = [1, 1]} : vector<8x64xf32> to vector<8x32xf32>
    %213 = vector.extract_strided_slice %211 {offsets = [0, 32], sizes = [8, 32], strides = [1, 1]} : vector<8x64xf32> to vector<8x32xf32>
    %214 = arith.mulf %212, %213 : vector<8x32xf32>
    %215 = arith.subf %212, %213 : vector<8x32xf32>
    %216 = tpu.concatenate %212, %213, %214, %215 in 1 : vector<8x32xf32>, vector<8x32xf32>, vector<8x32xf32>, vector<8x32xf32> -> vector<8x128xf32>
    %c0_54 = arith.constant 0 : index
    %c0_55 = arith.constant 0 : index
    %217 = vector.load %arg6[%c0_54, %c0_55] : memref<128x32xf32, #tpu.memory_space<vmem>>, vector<128x32xf32>
    %cst_56 = arith.constant dense<0.000000e+00> : vector<8x32xf32>
    %218 = tpu.matmul %216, %217, %cst_56 {dimension_numbers = #tpu.dot_dimension_numbers<[1], [0], [0], [1], [0, 0, 1, 1], [], []>} : vector<8x128xf32>, vector<128x32xf32>, vector<8x32xf32> -> vector<8x32xf32>
    %c0_57 = arith.constant 0 : index
    %c0_58 = arith.constant 0 : index
    %219 = vector.load %arg7[%c0_57, %c0_58] : memref<1x32xf32, #tpu.memory_space<vmem>>, vector<1x32xf32>
    %220 = vector.broadcast %219 : vector<1x32xf32> to vector<8x32xf32>
    %221 = arith.addf %218, %220 : vector<8x32xf32>
    %cst_59 = arith.constant 0.000000e+00 : f32
    %222 = vector.broadcast %cst_59 : f32 to vector<8x32xf32>
    %223 = arith.maximumf %221, %222 : vector<8x32xf32>
    %c0_60 = arith.constant 0 : index
    %c0_61 = arith.constant 0 : index
    %224 = vector.load %arg8[%c0_60, %c0_61] : memref<32x128xf32, #tpu.memory_space<vmem>>, vector<32x128xf32>
    %cst_62 = arith.constant dense<0.000000e+00> : vector<8x128xf32>
    %225 = tpu.matmul %223, %224, %cst_62 {dimension_numbers = #tpu.dot_dimension_numbers<[1], [0], [0], [1], [0, 0, 1, 1], [], []>} : vector<8x32xf32>, vector<32x128xf32>, vector<8x128xf32> -> vector<8x128xf32>
    %c0_63 = arith.constant 0 : index
    %c0_64 = arith.constant 0 : index
    %226 = vector.load %arg9[%c0_63, %c0_64] : memref<1x128xf32, #tpu.memory_space<vmem>>, vector<1x128xf32>
    %227 = vector.broadcast %226 : vector<1x128xf32> to vector<8x128xf32>
    %228 = arith.addf %225, %227 : vector<8x128xf32>
    %c0_65 = arith.constant 0 : index
    %c0_66 = arith.constant 0 : index
    %229 = vector.load %arg10[%c0_65, %c0_66] : memref<8x128xf32, #tpu.memory_space<vmem>>, vector<8x128xf32>
    tpu.vector_store %arg10[%c0_65, %c0_66], %228 {strides = array<i32>} : memref<8x128xf32, #tpu.memory_space<vmem>>, vector<8x128xf32>,
    return
  }
}

</mosaic_0001>

<llo_original>
// kernel: bilstm_nli_forward.1
$region0: #{bilstm_nli_forward.1}
  #allocation0 [shape = 'u32[]', space=smem, size = 0x4, offset = 0x4, fixed_abs, tag = 'smem constant byte address 0x4 - core index']
  #allocation1 [shape = 'u32[144,128]{1,0:T(1,128)}', space=vmem, size = 0x12000, scoped, tag = 'internal scratch']
  #allocation2 [shape = 'f32[8,8,512]{2,1,0:T(8,128)}', space=vmem, size = 0x20000, scoped, tag = 'scratch operand']
  %s0 = inlined_call_operand.vmem [shape: f32[8,8,64], index: 0, kind: input, shape index: {}]
  %s1 = inlined_call_operand.vmem [shape: f32[64,512], index: 1, kind: input, shape index: {}]
  %s2 = inlined_call_operand.vmem [shape: f32[1,512], index: 2, kind: input, shape index: {}]
  %s3 = inlined_call_operand.vmem [shape: f32[128,512], index: 3, kind: input, shape index: {}]
  %s4 = inlined_call_operand.vmem [shape: f32[256,64], index: 4, kind: input, shape index: {}]
  %s5 = inlined_call_operand.vmem [shape: f32[1,64], index: 5, kind: input, shape index: {}]
  %s6 = inlined_call_operand.vmem [shape: f32[128,32], index: 6, kind: input, shape index: {}]
  %s7 = inlined_call_operand.vmem [shape: f32[1,32], index: 7, kind: input, shape index: {}]
  %s8 = inlined_call_operand.vmem [shape: f32[32,128], index: 8, kind: input, shape index: {}]
  %s9 = inlined_call_operand.vmem [shape: f32[1,128], index: 9, kind: input, shape index: {}]
  %s10 = inlined_call_operand.vmem [shape: f32[8,128], index: 10, kind: output, shape index: {}]
  %s11 = sld [smem:[#allocation0]]
  $region50: #{bilstm_nli_forward.1} parent=0
    _
  %s13 = ssub.s32 1, %s11
  %s14 = scalar_select 0, %s13, %s11
  // Predicated region
  $region2: #{bilstm_nli_forward.1} parent=0 // pred_check
    _
  $region3: #{bilstm_nli_forward.1} parent=0 // pred_check_branch
    %16 = sbr.rel (0) target = $region5
  $region4: #{bilstm_nli_forward.1} parent=0 // pred_region
    _
  $region5: #{bilstm_nli_forward.1} parent=0 // pred_fallthru
    _
  // Predicated region
  $region6: #{bilstm_nli_forward.1} parent=0 // pred_check
    _
  $region7: #{bilstm_nli_forward.1} parent=0 // pred_check_branch
    %18 = sbr.rel (0) target = $region9
  $region8: #{bilstm_nli_forward.1} parent=0 // pred_region
    _
  $region9: #{bilstm_nli_forward.1} parent=0 // pred_fallthru
    _
  // Predicated region
  $region10: #{bilstm_nli_forward.1} parent=0 // pred_check
    _
  $region11: #{bilstm_nli_forward.1} parent=0 // pred_check_branch
    %20 = sbr.rel (0) target = $region13
  $region12: #{bilstm_nli_forward.1} parent=0 // pred_region
    _
  $region13: #{bilstm_nli_forward.1} parent=0 // pred_fallthru
    _
  // Predicated region
  $region14: #{bilstm_nli_forward.1} parent=0 // pred_check
    _
  $region15: #{bilstm_nli_forward.1} parent=0 // pred_check_branch
    %22 = sbr.rel (0) target = $region17
  $region16: #{bilstm_nli_forward.1} parent=0 // pred_region
    _
  $region17: #{bilstm_nli_forward.1} parent=0 // pred_fallthru
    _
  // Predicated region
  $region18: #{bilstm_nli_forward.1} parent=0 // pred_check
    _
  $region19: #{bilstm_nli_forward.1} parent=0 // pred_check_branch
    %24 = sbr.rel (0) target = $region21
  $region20: #{bilstm_nli_forward.1} parent=0 // pred_region
    _
  $region21: #{bilstm_nli_forward.1} parent=0 // pred_fallthru
    _
  // Predicated region
  $region22: #{bilstm_nli_forward.1} parent=0 // pred_check
    _
  $region23: #{bilstm_nli_forward.1} parent=0 // pred_check_branch
    %26 = sbr.rel (0) target = $region25
  $region24: #{bilstm_nli_forward.1} parent=0 // pred_region
    _
  $region25: #{bilstm_nli_forward.1} parent=0 // pred_fallthru
    _
  // Predicated region
  $region26: #{bilstm_nli_forward.1} parent=0 // pred_check
    _
  $region27: #{bilstm_nli_forward.1} parent=0 // pred_check_branch
    %28 = sbr.rel (0) target = $region29
  $region28: #{bilstm_nli_forward.1} parent=0 // pred_region
    _
  $region29: #{bilstm_nli_forward.1} parent=0 // pred_fallthru
    _
  // Predicated region
  $region30: #{bilstm_nli_forward.1} parent=0 // pred_check
    _
  $region31: #{bilstm_nli_forward.1} parent=0 // pred_check_branch
    %30 = sbr.rel (0) target = $region33
  $region32: #{bilstm_nli_forward.1} parent=0 // pred_region
    _
  $region33: #{bilstm_nli_forward.1} parent=0 // pred_fallthru
    _
  // Predicated region
  $region34: #{bilstm_nli_forward.1} parent=0 // pred_check
    _
  $region35: #{bilstm_nli_forward.1} parent=0 // pred_check_branch
    %32 = sbr.rel (0) target = $region37
  $region36: #{bilstm_nli_forward.1} parent=0 // pred_region
    _
  $region37: #{bilstm_nli_forward.1} parent=0 // pred_fallthru
    _
  // Predicated region
  $region38: #{bilstm_nli_forward.1} parent=0 // pred_check
    _
  $region39: #{bilstm_nli_forward.1} parent=0 // pred_check_branch
    %34 = sbr.rel (0) target = $region41
  $region40: #{bilstm_nli_forward.1} parent=0 // pred_region
    _
  $region41: #{bilstm_nli_forward.1} parent=0 // pred_fallthru
    _
  %v35 = vld [vmem:[%s0] sm:$0xff]
  %v36 = vld [vmem:[%s0 + $0x8] sm:$0xff]
  %v37 = vld [vmem:[%s0 + $0x10] sm:$0xff]
  %v38 = vld [vmem:[%s0 + $0x18] sm:$0xff]
  %v39 = vld [vmem:[%s0 + $0x20] sm:$0xff]
  %v40 = vld [vmem:[%s0 + $0x28] sm:$0xff]
  %v41 = vld [vmem:[%s0 + $0x30] sm:$0xff]
  %v42 = vld [vmem:[%s0 + $0x38] sm:$0xff]
  %v43 = vld [vmem:[%s1] sm:$0xff]
  %v44 = vld [vmem:[%s1 + $0x8] sm:$0xff]
  %v45 = vld [vmem:[%s1 + $0x10] sm:$0xff]
  %v46 = vld [vmem:[%s1 + $0x18] sm:$0xff]
  %v47 = vld [vmem:[%s1 + $0x20] sm:$0xff]
  %v48 = vld [vmem:[%s1 + $0x28] sm:$0xff]
  %v49 = vld [vmem:[%s1 + $0x30] sm:$0xff]
  %v50 = vld [vmem:[%s1 + $0x38] sm:$0xff]
  %v51 = vld [vmem:[%s1 + $0x40] sm:$0xff]
  %v52 = vld [vmem:[%s1 + $0x48] sm:$0xff]
  %v53 = vld [vmem:[%s1 + $0x50] sm:$0xff]
  %v54 = vld [vmem:[%s1 + $0x58] sm:$0xff]
  %v55 = vld [vmem:[%s1 + $0x60] sm:$0xff]
  %v56 = vld [vmem:[%s1 + $0x68] sm:$0xff]
  %v57 = vld [vmem:[%s1 + $0x70] sm:$0xff]
  %v58 = vld [vmem:[%s1 + $0x78] sm:$0xff]
  %v59 = vld [vmem:[%s1 + $0x80] sm:$0xff]
  %v60 = vld [vmem:[%s1 + $0x88] sm:$0xff]
  %v61 = vld [vmem:[%s1 + $0x90] sm:$0xff]
  %v62 = vld [vmem:[%s1 + $0x98] sm:$0xff]
  %v63 = vld [vmem:[%s1 + $0xa0] sm:$0xff]
  %v64 = vld [vmem:[%s1 + $0xa8] sm:$0xff]
  %v65 = vld [vmem:[%s1 + $0xb0] sm:$0xff]
  %v66 = vld [vmem:[%s1 + $0xb8] sm:$0xff]
  %v67 = vld [vmem:[%s1 + $0xc0] sm:$0xff]
  %v68 = vld [vmem:[%s1 + $0xc8] sm:$0xff]
  %v69 = vld [vmem:[%s1 + $0xd0] sm:$0xff]
  %v70 = vld [vmem:[%s1 + $0xd8] sm:$0xff]
  %v71 = vld [vmem:[%s1 + $0xe0] sm:$0xff]
  %v72 = vld [vmem:[%s1 + $0xe8] sm:$0xff]
  %v73 = vld [vmem:[%s1 + $0xf0] sm:$0xff]
  %v74 = vld [vmem:[%s1 + $0xf8] sm:$0xff]
  %v75 = vld [vmem:[%s2] sm:$0xf]
  %v77 = vlaneseq
  %v78 = vshrl.u32 %v77, 7
  %v79 = vsub.s32 0, %v78
  %v80 = vrot.slane %v75, %v79
  %v81 = vlaneseq
  %v82 = vshrl.u32 %v81, 7
  %v83 = vsub.s32 1, %v82
  %v84 = vrot.slane %v75, %v83
  %v85 = vlaneseq
  %v86 = vshrl.u32 %v85, 7
  %v87 = vsub.s32 2, %v86
  %v88 = vrot.slane %v75, %v87
  %v89 = vlaneseq
  %v90 = vshrl.u32 %v89, 7
  %v91 = vsub.s32 3, %v90
  %v92 = vrot.slane %v75, %v91
  %vm97 = vcmask 523264
  %v99 = vsel %vm97, %v35, 0
  %v102 = vsel %vm97, %v36, 0
  %v105 = vsel %vm97, %v37, 0
  %v108 = vsel %vm97, %v38, 0
  %v111 = vsel %vm97, %v39, 0
  %v114 = vsel %vm97, %v40, 0
  %v117 = vsel %vm97, %v41, 0
  %v120 = vsel %vm97, %v42, 0
  %122 = vmatprep.subr.mxu0 0.0
  %123 = vmatpush1.msra.mxu0 0.0
  %124 = vmatprep.subr.mxu0 0.0
  %125 = vmatpush1.msra.mxu0 0.0
  %126 = vmatprep.subr.mxu0 0.0
  %127 = vmatpush1.msra.mxu0 0.0
  %128 = vmatprep.subr.mxu0 0.0
  %129 = vmatpush1.msra.mxu0 0.0
  %130 = vmatprep.subr.mxu0 0.0
  %131 = vmatpush1.msra.mxu0 0.0
  %132 = vmatprep.subr.mxu0 0.0
  %133 = vmatpush1.msra.mxu0 0.0
  %134 = vmatprep.subr.mxu0 0.0
  %135 = vmatpush1.msra.mxu0 0.0
  %136 = vmatprep.subr.mxu0 0.0
  %137 = vmatpush1.msra.mxu0 0.0
  %138 = vmatprep.subr.mxu0 %v72
  %139 = vmatpush1.msra.mxu0 %v71
  %140 = vmatprep.subr.mxu0 %v68
  %141 = vmatpush1.msra.mxu0 %v67
  %142 = vmatprep.subr.mxu0 %v64
  %143 = vmatpush1.msra.mxu0 %v63
  %144 = vmatprep.subr.mxu0 %v60
  %145 = vmatpush1.msra.mxu0 %v59
  %146 = vmatprep.subr.mxu0 %v56
  %147 = vmatpush1.msra.mxu0 %v55
  %148 = vmatprep.subr.mxu0 %v52
  %149 = vmatpush1.msra.mxu0 %v51
  %150 = vmatprep.subr.mxu0 %v48
  %151 = vmatpush1.msra.mxu0 %v47
  %152 = vmatprep.subr.mxu0 %v44
  %153 = vmatpush1.msra.mxu0 %v43
  %154 = vmatprep.subr.mxu0 0.0
  %155 = vmatpush2.msra.mxu0 0.0
  %156 = vmatprep.subr.mxu0 0.0
  %157 = vmatpush2.msra.mxu0 0.0
  %158 = vmatprep.subr.mxu0 0.0
  %159 = vmatpush2.msra.mxu0 0.0
  %160 = vmatprep.subr.mxu0 0.0
  %161 = vmatpush2.msra.mxu0 0.0
  %162 = vmatprep.subr.mxu0 0.0
  %163 = vmatpush2.msra.mxu0 0.0
  %164 = vmatprep.subr.mxu0 0.0
  %165 = vmatpush2.msra.mxu0 0.0
  %166 = vmatprep.subr.mxu0 0.0
  %167 = vmatpush2.msra.mxu0 0.0
  %168 = vmatprep.subr.mxu0 0.0
  %169 = vmatpush2.msra.mxu0 0.0
  %170 = vmatprep.subr.mxu0 0.0
  %171 = vmatpush2.msra.mxu0 0.0
  %172 = vmatprep.subr.mxu0 0.0
  %173 = vmatpush2.msra.mxu0 0.0
  %174 = vmatprep.subr.mxu0 0.0
  %175 = vmatpush2.msra.mxu0 0.0
  %176 = vmatprep.subr.mxu0 0.0
  %177 = vmatpush2.msra.mxu0 0.0
  %178 = vmatprep.subr.mxu0 0.0
  %179 = vmatpush2.msra.mxu0 0.0
  %180 = vmatprep.subr.mxu0 0.0
  %181 = vmatpush2.msra.mxu0 0.0
  %182 = vmatprep.subr.mxu0 0.0
  %183 = vmatpush2.msra.mxu0 0.0
  %184 = vmatprep.subr.mxu0 0.0
  %185 = vmatpush2.msra.mxu0 0.0
  %186 = vmatprep.mubr.f32.mxu0 0.0
  %187 = vmatmul.mubr.f32.gmra.mxu0 %v99
  %v188 = vpop.f32.mrf.mxu0
  %v189 = vadd.f32 %v80, %v188
  %v190 = vpop.f32.mrf.mxu0
  %v191 = vadd.f32 %v84, %v190
  %192 = vmatprep.mubr.f32.mxu0 0.0
  %193 = vmatmul.mubr.f32.gmra.mxu0 %v102
  %v194 = vpop.f32.mrf.mxu0
  %v195 = vadd.f32 %v80, %v194
  %v196 = vpop.f32.mrf.mxu0
  %v197 = vadd.f32 %v84, %v196
  %198 = vmatprep.mubr.f32.mxu0 0.0
  %199 = vmatmul.mubr.f32.gmra.mxu0 %v105
  %v200 = vpop.f32.mrf.mxu0
  %v201 = vadd.f32 %v80, %v200
  %v202 = vpop.f32.mrf.mxu0
  %v203 = vadd.f32 %v84, %v202
  %204 = vmatprep.mubr.f32.mxu0 0.0
  %205 = vmatmul.mubr.f32.gmra.mxu0 %v108
  %v206 = vpop.f32.mrf.mxu0
  %v207 = vadd.f32 %v80, %v206
  %v208 = vpop.f32.mrf.mxu0
  %v209 = vadd.f32 %v84, %v208
  %210 = vmatprep.mubr.f32.mxu0 0.0
  %211 = vmatmul.mubr.f32.gmra.mxu0 %v111
  %v212 = vpop.f32.mrf.mxu0
  %v213 = vadd.f32 %v80, %v212
  %v214 = vpop.f32.mrf.mxu0
  %v215 = vadd.f32 %v84, %v214
  %216 = vmatprep.mubr.f32.mxu0 0.0
  %217 = vmatmul.mubr.f32.gmra.mxu0 %v114
  %v218 = vpop.f32.mrf.mxu0
  %v219 = vadd.f32 %v80, %v218
  %v220 = vpop.f32.mrf.mxu0
  %v221 = vadd.f32 %v84, %v220
  %222 = vmatprep.mubr.f32.mxu0 0.0
  %223 = vmatmul.mubr.f32.gmra.mxu0 %v117
  %v224 = vpop.f32.mrf.mxu0
  %v225 = vadd.f32 %v80, %v224
  %v226 = vpop.f32.mrf.mxu0
  %v227 = vadd.f32 %v84, %v226
  %228 = vmatprep.mubr.f32.mxu0 0.0
  %229 = vmatmul.mubr.f32.gmra.mxu0 %v120
  %v230 = vpop.f32.mrf.mxu0
  %v231 = vadd.f32 %v80, %v230
  %v232 = vpop.f32.mrf.mxu0
  %v233 = vadd.f32 %v84, %v232
  %234 = vdwg.mxu0
  %235 = vmatprep.subr.mxu0 0.0
  %236 = vmatpush1.msra.mxu0 0.0
  %237 = vmatprep.subr.mxu0 0.0
  %238 = vmatpush1.msra.mxu0 0.0
  %239 = vmatprep.subr.mxu0 0.0
  %240 = vmatpush1.msra.mxu0 0.0
  %241 = vmatprep.subr.mxu0 0.0
  %242 = vmatpush1.msra.mxu0 0.0
  %243 = vmatprep.subr.mxu0 0.0
  %244 = vmatpush1.msra.mxu0 0.0
  %245 = vmatprep.subr.mxu0 0.0
  %246 = vmatpush1.msra.mxu0 0.0
  %247 = vmatprep.subr.mxu0 0.0
  %248 = vmatpush1.msra.mxu0 0.0
  %249 = vmatprep.subr.mxu0 0.0
  %250 = vmatpush1.msra.mxu0 0.0
  %251 = vmatprep.subr.mxu0 %v74
  %252 = vmatpush1.msra.mxu0 %v73
  %253 = vmatprep.subr.mxu0 %v70
  %254 = vmatpush1.msra.mxu0 %v69
  %255 = vmatprep.subr.mxu0 %v66
  %256 = vmatpush1.msra.mxu0 %v65
  %257 = vmatprep.subr.mxu0 %v62
  %258 = vmatpush1.msra.mxu0 %v61
  %259 = vmatprep.subr.mxu0 %v58
  %260 = vmatpush1.msra.mxu0 %v57
  %261 = vmatprep.subr.mxu0 %v54
  %262 = vmatpush1.msra.mxu0 %v53
  %263 = vmatprep.subr.mxu0 %v50
  %264 = vmatpush1.msra.mxu0 %v49
  %265 = vmatprep.subr.mxu0 %v46
  %266 = vmatpush1.msra.mxu0 %v45
  %267 = vmatprep.subr.mxu0 0.0
  %268 = vmatpush2.msra.mxu0 0.0
  %269 = vmatprep.subr.mxu0 0.0
  %270 = vmatpush2.msra.mxu0 0.0
  %271 = vmatprep.subr.mxu0 0.0
  %272 = vmatpush2.msra.mxu0 0.0
  %273 = vmatprep.subr.mxu0 0.0
  %274 = vmatpush2.msra.mxu0 0.0
  %275 = vmatprep.subr.mxu0 0.0
  %276 = vmatpush2.msra.mxu0 0.0
  %277 = vmatprep.subr.mxu0 0.0
  %278 = vmatpush2.msra.mxu0 0.0
  %279 = vmatprep.subr.mxu0 0.0
  %280 = vmatpush2.msra.mxu0 0.0
  %281 = vmatprep.subr.mxu0 0.0
  %282 = vmatpush2.msra.mxu0 0.0
  %283 = vmatprep.subr.mxu0 0.0
  %284 = vmatpush2.msra.mxu0 0.0
  %285 = vmatprep.subr.mxu0 0.0
  %286 = vmatpush2.msra.mxu0 0.0
  %287 = vmatprep.subr.mxu0 0.0
  %288 = vmatpush2.msra.mxu0 0.0
  %289 = vmatprep.subr.mxu0 0.0
  %290 = vmatpush2.msra.mxu0 0.0
  %291 = vmatprep.subr.mxu0 0.0
  %292 = vmatpush2.msra.mxu0 0.0
  %293 = vmatprep.subr.mxu0 0.0
  %294 = vmatpush2.msra.mxu0 0.0
  %295 = vmatprep.subr.mxu0 0.0
  %296 = vmatpush2.msra.mxu0 0.0
  %297 = vmatprep.subr.mxu0 0.0
  %298 = vmatpush2.msra.mxu0 0.0
  %299 = vmatprep.mubr.f32.mxu0 0.0
  %300 = vmatmul.mubr.f32.gmra.mxu0 %v99
  %v301 = vpop.f32.mrf.mxu0
  %v302 = vadd.f32 %v88, %v301
  %v303 = vpop.f32.mrf.mxu0
  %v304 = vadd.f32 %v92, %v303
  %305 = vmatprep.mubr.f32.mxu0 0.0
  %306 = vmatmul.mubr.f32.gmra.mxu0 %v102
  %v307 = vpop.f32.mrf.mxu0
  %v308 = vadd.f32 %v88, %v307
  %v309 = vpop.f32.mrf.mxu0
  %v310 = vadd.f32 %v92, %v309
  %311 = vmatprep.mubr.f32.mxu0 0.0
  %312 = vmatmul.mubr.f32.gmra.mxu0 %v105
  %v313 = vpop.f32.mrf.mxu0
  %v314 = vadd.f32 %v88, %v313
  %v315 = vpop.f32.mrf.mxu0
  %v316 = vadd.f32 %v92, %v315
  %317 = vmatprep.mubr.f32.mxu0 0.0
  %318 = vmatmul.mubr.f32.gmra.mxu0 %v108
  %v319 = vpop.f32.mrf.mxu0
  %v320 = vadd.f32 %v88, %v319
  %v321 = vpop.f32.mrf.mxu0
  %v322 = vadd.f32 %v92, %v321
  %323 = vmatprep.mubr.f32.mxu0 0.0
  %324 = vmatmul.mubr.f32.gmra.mxu0 %v111
  %v325 = vpop.f32.mrf.mxu0
  %v326 = vadd.f32 %v88, %v325
  %v327 = vpop.f32.mrf.mxu0
  %v328 = vadd.f32 %v92, %v327
  %329 = vmatprep.mubr.f32.mxu0 0.0
  %330 = vmatmul.mubr.f32.gmra.mxu0 %v114
  %v331 = vpop.f32.mrf.mxu0
  %v332 = vadd.f32 %v88, %v331
  %v333 = vpop.f32.mrf.mxu0
  %v334 = vadd.f32 %v92, %v333
  %335 = vmatprep.mubr.f32.mxu0 0.0
  %336 = vmatmul.mubr.f32.gmra.mxu0 %v117
  %v337 = vpop.f32.mrf.mxu0
  %v338 = vadd.f32 %v88, %v337
  %v339 = vpop.f32.mrf.mxu0
  %v340 = vadd.f32 %v92, %v339
  %341 = vmatprep.mubr.f32.mxu0 0.0
  %342 = vmatmul.mubr.f32.gmra.mxu0 %v120
  %v343 = vpop.f32.mrf.mxu0
  %v344 = vadd.f32 %v88, %v343
  %v345 = vpop.f32.mrf.mxu0
  %v346 = vadd.f32 %v92, %v345
  %347 = vdwg.mxu0
  %348 = vst [vmem:[#allocation2] sm:$0xff] %v189
  %349 = vst [vmem:[#allocation2 + $0x8] sm:$0xff] %v191
  %350 = vst [vmem:[#allocation2 + $0x10] sm:$0xff] %v302
  %351 = vst [vmem:[#allocation2 + $0x18] sm:$0xff] %v304
  %352 = vst [vmem:[#allocation2 + $0x20] sm:$0xff] %v195
  %353 = vst [vmem:[#allocation2 + $0x28] sm:$0xff] %v197
  %354 = vst [vmem:[#allocation2 + $0x30] sm:$0xff] %v308
  %355 = vst [vmem:[#allocation2 + $0x38] sm:$0xff] %v310
  %356 = vst [vmem:[#allocation2 + $0x40] sm:$0xff] %v201
  %357 = vst [vmem:[#allocation2 + $0x48] sm:$0xff] %v203
  %358 = vst [vmem:[#allocation2 + $0x50] sm:$0xff] %v314
  %359 = vst [vmem:[#allocation2 + $0x58] sm:$0xff] %v316
  %360 = vst [vmem:[#allocation2 + $0x60] sm:$0xff] %v207
  %361 = vst [vmem:[#allocation2 + $0x68] sm:$0xff] %v209
  %362 = vst [vmem:[#allocation2 + $0x70] sm:$0xff] %v320
  %363 = vst [vmem:[#allocation2 + $0x78] sm:$0xff] %v322
  %364 = vst [vmem:[#allocation2 + $0x80] sm:$0xff] %v213
  %365 = vst [vmem:[#allocation2 + $0x88] sm:$0xff] %v215
  %366 = vst [vmem:[#allocation2 + $0x90] sm:$0xff] %v326
  %367 = vst [vmem:[#allocation2 + $0x98] sm:$0xff] %v328
  %368 = vst [vmem:[#allocation2 + $0xa0] sm:$0xff] %v219
  %369 = vst [vmem:[#allocation2 + $0xa8] sm:$0xff] %v221
  %370 = vst [vmem:[#allocation2 + $0xb0] sm:$0xff] %v332
  %371 = vst [vmem:[#allocation2 + $0xb8] sm:$0xff] %v334
  %372 = vst [vmem:[#allocation2 + $0xc0] sm:$0xff] %v225
  %373 = vst [vmem:[#allocation2 + $0xc8] sm:$0xff] %v227
  %374 = vst [vmem:[#allocation2 + $0xd0] sm:$0xff] %v338
  %375 = vst [vmem:[#allocation2 + $0xd8] sm:$0xff] %v340
  %376 = vst [vmem:[#allocation2 + $0xe0] sm:$0xff] %v231
  %377 = vst [vmem:[#allocation2 + $0xe8] sm:$0xff] %v233
  %378 = vst [vmem:[#allocation2 + $0xf0] sm:$0xff] %v344
  %379 = vst [vmem:[#allocation2 + $0xf8] sm:$0xff] %v346
  %v380 = vld [vmem:[%s3] sm:$0xff]
  %v381 = vld [vmem:[%s3 + $0x8] sm:$0xff]
  %v382 = vld [vmem:[%s3 + $0x10] sm:$0xff]
  %v383 = vld [vmem:[%s3 + $0x18] sm:$0xff]
  %v384 = vld [vmem:[%s3 + $0x20] sm:$0xff]
  %v385 = vld [vmem:[%s3 + $0x28] sm:$0xff]
  %v386 = vld [vmem:[%s3 + $0x30] sm:$0xff]
  %v387 = vld [vmem:[%s3 + $0x38] sm:$0xff]
  %v388 = vld [vmem:[%s3 + $0x40] sm:$0xff]
  %v389 = vld [vmem:[%s3 + $0x48] sm:$0xff]
  %v390 = vld [vmem:[%s3 + $0x50] sm:$0xff]
  %v391 = vld [vmem:[%s3 + $0x58] sm:$0xff]
  %v392 = vld [vmem:[%s3 + $0x60] sm:$0xff]
  %v393 = vld [vmem:[%s3 + $0x68] sm:$0xff]
  %v394 = vld [vmem:[%s3 + $0x70] sm:$0xff]
  %v395 = vld [vmem:[%s3 + $0x78] sm:$0xff]
  %v396 = vld [vmem:[%s3 + $0x80] sm:$0xff]
  %v397 = vld [vmem:[%s3 + $0x88] sm:$0xff]
  %v398 = vld [vmem:[%s3 + $0x90] sm:$0xff]
  %v399 = vld [vmem:[%s3 + $0x98] sm:$0xff]
  %v400 = vld [vmem:[%s3 + $0xa0] sm:$0xff]
  %v401 = vld [vmem:[%s3 + $0xa8] sm:$0xff]
  %v402 = vld [vmem:[%s3 + $0xb0] sm:$0xff]
  %v403 = vld [vmem:[%s3 + $0xb8] sm:$0xff]
  %v404 = vld [vmem:[%s3 + $0xc0] sm:$0xff]
  %v405 = vld [vmem:[%s3 + $0xc8] sm:$0xff]
  %v406 = vld [vmem:[%s3 + $0xd0] sm:$0xff]
  %v407 = vld [vmem:[%s3 + $0xd8] sm:$0xff]
  %v408 = vld [vmem:[%s3 + $0xe0] sm:$0xff]
  %v409 = vld [vmem:[%s3 + $0xe8] sm:$0xff]
  %v410 = vld [vmem:[%s3 + $0xf0] sm:$0xff]
  %v411 = vld [vmem:[%s3 + $0xf8] sm:$0xff]
  %v412 = vld [vmem:[%s3 + $0x100] sm:$0xff]
  %v413 = vld [vmem:[%s3 + $0x108] sm:$0xff]
  %v414 = vld [vmem:[%s3 + $0x110] sm:$0xff]
  %v415 = vld [vmem:[%s3 + $0x118] sm:$0xff]
  %v416 = vld [vmem:[%s3 + $0x120] sm:$0xff]
  %v417 = vld [vmem:[%s3 + $0x128] sm:$0xff]
  %v418 = vld [vmem:[%s3 + $0x130] sm:$0xff]
  %v419 = vld [vmem:[%s3 + $0x138] sm:$0xff]
  %v420 = vld [vmem:[%s3 + $0x140] sm:$0xff]
  %v421 = vld [vmem:[%s3 + $0x148] sm:$0xff]
  %v422 = vld [vmem:[%s3 + $0x150] sm:$0xff]
  %v423 = vld [vmem:[%s3 + $0x158] sm:$0xff]
  %v424 = vld [vmem:[%s3 + $0x160] sm:$0xff]
  %v425 = vld [vmem:[%s3 + $0x168] sm:$0xff]
  %v426 = vld [vmem:[%s3 + $0x170] sm:$0xff]
  %v427 = vld [vmem:[%s3 + $0x178] sm:$0xff]
  %v428 = vld [vmem:[%s3 + $0x180] sm:$0xff]
  %v429 = vld [vmem:[%s3 + $0x188] sm:$0xff]
  %v430 = vld [vmem:[%s3 + $0x190] sm:$0xff]
  %v431 = vld [vmem:[%s3 + $0x198] sm:$0xff]
  %v432 = vld [vmem:[%s3 + $0x1a0] sm:$0xff]
  %v433 = vld [vmem:[%s3 + $0x1a8] sm:$0xff]
  %v434 = vld [vmem:[%s3 + $0x1b0] sm:$0xff]
  %v435 = vld [vmem:[%s3 + $0x1b8] sm:$0xff]
  %v436 = vld [vmem:[%s3 + $0x1c0] sm:$0xff]
  %v437 = vld [vmem:[%s3 + $0x1c8] sm:$0xff]
  %v438 = vld [vmem:[%s3 + $0x1d0] sm:$0xff]
  %v439 = vld [vmem:[%s3 + $0x1d8] sm:$0xff]
  %v440 = vld [vmem:[%s3 + $0x1e0] sm:$0xff]
  %v441 = vld [vmem:[%s3 + $0x1e8] sm:$0xff]
  %v442 = vld [vmem:[%s3 + $0x1f0] sm:$0xff]
  %v443 = vld [vmem:[%s3 + $0x1f8] sm:$0xff]
  %v444 = vld [vmem:[#allocation2] sm:$0xff]
  %v445 = vld [vmem:[#allocation2 + $0x8] sm:$0xff]
  %v446 = vld [vmem:[#allocation2 + $0x10] sm:$0xff]
  %v447 = vld [vmem:[#allocation2 + $0x18] sm:$0xff]
  %448 = vmatprep.subr.mxu0 %v441
  %449 = vmatpush1.msra.mxu0 %v440
  %450 = vmatprep.subr.mxu0 %v437
  %451 = vmatpush1.msra.mxu0 %v436
  %452 = vmatprep.subr.mxu0 %v433
  %453 = vmatpush1.msra.mxu0 %v432
  %454 = vmatprep.subr.mxu0 %v429
  %455 = vmatpush1.msra.mxu0 %v428
  %456 = vmatprep.subr.mxu0 %v425
  %457 = vmatpush1.msra.mxu0 %v424
  %458 = vmatprep.subr.mxu0 %v421
  %459 = vmatpush1.msra.mxu0 %v420
  %460 = vmatprep.subr.mxu0 %v417
  %461 = vmatpush1.msra.mxu0 %v416
  %462 = vmatprep.subr.mxu0 %v413
  %463 = vmatpush1.msra.mxu0 %v412
  %464 = vmatprep.subr.mxu0 %v409
  %465 = vmatpush1.msra.mxu0 %v408
  %466 = vmatprep.subr.mxu0 %v405
  %467 = vmatpush1.msra.mxu0 %v404
  %468 = vmatprep.subr.mxu0 %v401
  %469 = vmatpush1.msra.mxu0 %v400
  %470 = vmatprep.subr.mxu0 %v397
  %471 = vmatpush1.msra.mxu0 %v396
  %472 = vmatprep.subr.mxu0 %v393
  %473 = vmatpush1.msra.mxu0 %v392
  %474 = vmatprep.subr.mxu0 %v389
  %475 = vmatpush1.msra.mxu0 %v388
  %476 = vmatprep.subr.mxu0 %v385
  %477 = vmatpush1.msra.mxu0 %v384
  %478 = vmatprep.subr.mxu0 %v381
  %479 = vmatpush1.msra.mxu0 %v380
  %480 = vmatprep.subr.mxu0 0.0
  %481 = vmatpush2.msra.mxu0 0.0
  %482 = vmatprep.subr.mxu0 0.0
  %483 = vmatpush2.msra.mxu0 0.0
  %484 = vmatprep.subr.mxu0 0.0
  %485 = vmatpush2.msra.mxu0 0.0
  %486 = vmatprep.subr.mxu0 0.0
  %487 = vmatpush2.msra.mxu0 0.0
  %488 = vmatprep.subr.mxu0 0.0
  %489 = vmatpush2.msra.mxu0 0.0
  %490 = vmatprep.subr.mxu0 0.0
  %491 = vmatpush2.msra.mxu0 0.0
  %492 = vmatprep.subr.mxu0 0.0
  %493 = vmatpush2.msra.mxu0 0.0
  %494 = vmatprep.subr.mxu0 0.0
  %495 = vmatpush2.msra.mxu0 0.0
  %496 = vmatprep.subr.mxu0 0.0
  %497 = vmatpush2.msra.mxu0 0.0
  %498 = vmatprep.subr.mxu0 0.0
  %499 = vmatpush2.msra.mxu0 0.0
  %500 = vmatprep.subr.mxu0 0.0
  %501 = vmatpush2.msra.mxu0 0.0
  %502 = vmatprep.subr.mxu0 0.0
  %503 = vmatpush2.msra.mxu0 0.0
  %504 = vmatprep.subr.mxu0 0.0
  %505 = vmatpush2.msra.mxu0 0.0
  %506 = vmatprep.subr.mxu0 0.0
  %507 = vmatpush2.msra.mxu0 0.0
  %508 = vmatprep.subr.mxu0 0.0
  %509 = vmatpush2.msra.mxu0 0.0
  %510 = vmatprep.subr.mxu0 0.0
  %511 = vmatpush2.msra.mxu0 0.0
  %512 = vmatprep.mubr.f32.mxu0 0.0
  %513 = vmatmul.mubr.f32.gmra.mxu0 0.0
  %v514 = vpop.f32.mrf.mxu0
  %v515 = vadd.f32 %v444, %v514
  %v516 = vpop.f32.mrf.mxu0
  %v517 = vadd.f32 %v445, %v516
  %518 = vdwg.mxu0
  %519 = vmatprep.subr.mxu0 %v443
  %520 = vmatpush1.msra.mxu0 %v442
  %521 = vmatprep.subr.mxu0 %v439
  %522 = vmatpush1.msra.mxu0 %v438
  %523 = vmatprep.subr.mxu0 %v435
  %524 = vmatpush1.msra.mxu0 %v434
  %525 = vmatprep.subr.mxu0 %v431
  %526 = vmatpush1.msra.mxu0 %v430
  %527 = vmatprep.subr.mxu0 %v427
  %528 = vmatpush1.msra.mxu0 %v426
  %529 = vmatprep.subr.mxu0 %v423
  %530 = vmatpush1.msra.mxu0 %v422
  %531 = vmatprep.subr.mxu0 %v419
  %532 = vmatpush1.msra.mxu0 %v418
  %533 = vmatprep.subr.mxu0 %v415
  %534 = vmatpush1.msra.mxu0 %v414
  %535 = vmatprep.subr.mxu0 %v411
  %536 = vmatpush1.msra.mxu0 %v410
  %537 = vmatprep.subr.mxu0 %v407
  %538 = vmatpush1.msra.mxu0 %v406
  %539 = vmatprep.subr.mxu0 %v403
  %540 = vmatpush1.msra.mxu0 %v402
  %541 = vmatprep.subr.mxu0 %v399
  %542 = vmatpush1.msra.mxu0 %v398
  %543 = vmatprep.subr.mxu0 %v395
  %544 = vmatpush1.msra.mxu0 %v394
  %545 = vmatprep.subr.mxu0 %v391
  %546 = vmatpush1.msra.mxu0 %v390
  %547 = vmatprep.subr.mxu0 %v387
  %548 = vmatpush1.msra.mxu0 %v386
  %549 = vmatprep.subr.mxu0 %v383
  %550 = vmatpush1.msra.mxu0 %v382
  %551 = vmatprep.subr.mxu0 0.0
  %552 = vmatpush2.msra.mxu0 0.0
  %553 = vmatprep.subr.mxu0 0.0
  %554 = vmatpush2.msra.mxu0 0.0
  %555 = vmatprep.subr.mxu0 0.0
  %556 = vmatpush2.msra.mxu0 0.0
  %557 = vmatprep.subr.mxu0 0.0
  %558 = vmatpush2.msra.mxu0 0.0
  %559 = vmatprep.subr.mxu0 0.0
  %560 = vmatpush2.msra.mxu0 0.0
  %561 = vmatprep.subr.mxu0 0.0
  %562 = vmatpush2.msra.mxu0 0.0
  %563 = vmatprep.subr.mxu0 0.0
  %564 = vmatpush2.msra.mxu0 0.0
  %565 = vmatprep.subr.mxu0 0.0
  %566 = vmatpush2.msra.mxu0 0.0
  %567 = vmatprep.subr.mxu0 0.0
  %568 = vmatpush2.msra.mxu0 0.0
  %569 = vmatprep.subr.mxu0 0.0
  %570 = vmatpush2.msra.mxu0 0.0
  %571 = vmatprep.subr.mxu0 0.0
  %572 = vmatpush2.msra.mxu0 0.0
  %573 = vmatprep.subr.mxu0 0.0
  %574 = vmatpush2.msra.mxu0 0.0
  %575 = vmatprep.subr.mxu0 0.0
  %576 = vmatpush2.msra.mxu0 0.0
  %577 = vmatprep.subr.mxu0 0.0
  %578 = vmatpush2.msra.mxu0 0.0
  %579 = vmatprep.subr.mxu0 0.0
  %580 = vmatpush2.msra.mxu0 0.0
  %581 = vmatprep.subr.mxu0 0.0
  %582 = vmatpush2.msra.mxu0 0.0
  %583 = vmatprep.mubr.f32.mxu0 0.0
  %584 = vmatmul.mubr.f32.gmra.mxu0 0.0
  %v585 = vpop.f32.mrf.mxu0
  %v586 = vadd.f32 %v446, %v585
  %v587 = vpop.f32.mrf.mxu0
  %v588 = vadd.f32 %v447, %v587
  %589 = vdwg.mxu0
  %v590 = vxor.u32 %v515, 2147483648
  %v591 = vxor.u32 %v517, 2147483648
  %v592 = vxor.u32 %v586, 2147483648
  %v593 = vmul.f32 %v590, 1.442695
  %v594 = vpow.pop %v593
  %v595 = vmul.f32 %v591, 1.442695
  %v596 = vpow.pop %v595
  %v597 = vmul.f32 %v592, 1.442695
  %v598 = vpow.pop %v597
  %v599 = vadd.f32 %v594, 1.0
  %v600 = vadd.f32 %v596, 1.0
  %v601 = vadd.f32 %v598, 1.0
  %v602 = vrcp.pop %v599
  %v603 = vmul.f32 1.0, %v602
  %v604 = vrcp.pop %v600
  %v605 = vmul.f32 1.0, %v604
  %v606 = vrcp.pop %v601
  %v607 = vmul.f32 1.0, %v606
  %v608 = vtanh.pop %v588
  %v609 = vmul.f32 %v605, 0.0
  %v610 = vmul.f32 %v603, %v608
  %v611 = vadd.f32 %v609, %v610
  %v612 = vtanh.pop %v611
  %v613 = vmul.f32 %v607, %v612
  %v614 = vadd.f32 %v613, 0.0
  %v615 = vmax.f32 %v613, -1.0
  %s616 = scalar_lea.vmem [#allocation2], 32
  %v617 = vld [vmem:[%s616] sm:$0xff]
  %v618 = vld [vmem:[%s616 + $0x8] sm:$0xff]
  %v619 = vld [vmem:[%s616 + $0x10] sm:$0xff]
  %v620 = vld [vmem:[%s616 + $0x18] sm:$0xff]
  %621 = vmatprep.subr.mxu0 %v441
  %622 = vmatpush1.msra.mxu0 %v440
  %623 = vmatprep.subr.mxu0 %v437
  %624 = vmatpush1.msra.mxu0 %v436
  %625 = vmatprep.subr.mxu0 %v433
  %626 = vmatpush1.msra.mxu0 %v432
  %627 = vmatprep.subr.mxu0 %v429
  %628 = vmatpush1.msra.mxu0 %v428
  %629 = vmatprep.subr.mxu0 %v425
  %630 = vmatpush1.msra.mxu0 %v424
  %631 = vmatprep.subr.mxu0 %v421
  %632 = vmatpush1.msra.mxu0 %v420
  %633 = vmatprep.subr.mxu0 %v417
  %634 = vmatpush1.msra.mxu0 %v416
  %635 = vmatprep.subr.mxu0 %v413
  %636 = vmatpush1.msra.mxu0 %v412
  %637 = vmatprep.subr.mxu0 %v409
  %638 = vmatpush1.msra.mxu0 %v408
  %639 = vmatprep.subr.mxu0 %v405
  %640 = vmatpush1.msra.mxu0 %v404
  %641 = vmatprep.subr.mxu0 %v401
  %642 = vmatpush1.msra.mxu0 %v400
  %643 = vmatprep.subr.mxu0 %v397
  %644 = vmatpush1.msra.mxu0 %v396
  %645 = vmatprep.subr.mxu0 %v393
  %646 = vmatpush1.msra.mxu0 %v392
  %647 = vmatprep.subr.mxu0 %v389
  %648 = vmatpush1.msra.mxu0 %v388
  %649 = vmatprep.subr.mxu0 %v385
  %650 = vmatpush1.msra.mxu0 %v384
  %651 = vmatprep.subr.mxu0 %v381
  %652 = vmatpush1.msra.mxu0 %v380
  %653 = vmatprep.subr.mxu0 0.0
  %654 = vmatpush2.msra.mxu0 0.0
  %655 = vmatprep.subr.mxu0 0.0
  %656 = vmatpush2.msra.mxu0 0.0
  %657 = vmatprep.subr.mxu0 0.0
  %658 = vmatpush2.msra.mxu0 0.0
  %659 = vmatprep.subr.mxu0 0.0
  %660 = vmatpush2.msra.mxu0 0.0
  %661 = vmatprep.subr.mxu0 0.0
  %662 = vmatpush2.msra.mxu0 0.0
  %663 = vmatprep.subr.mxu0 0.0
  %664 = vmatpush2.msra.mxu0 0.0
  %665 = vmatprep.subr.mxu0 0.0
  %666 = vmatpush2.msra.mxu0 0.0
  %667 = vmatprep.subr.mxu0 0.0
  %668 = vmatpush2.msra.mxu0 0.0
  %669 = vmatprep.subr.mxu0 0.0
  %670 = vmatpush2.msra.mxu0 0.0
  %671 = vmatprep.subr.mxu0 0.0
  %672 = vmatpush2.msra.mxu0 0.0
  %673 = vmatprep.subr.mxu0 0.0
  %674 = vmatpush2.msra.mxu0 0.0
  %675 = vmatprep.subr.mxu0 0.0
  %676 = vmatpush2.msra.mxu0 0.0
  %677 = vmatprep.subr.mxu0 0.0
  %678 = vmatpush2.msra.mxu0 0.0
  %679 = vmatprep.subr.mxu0 0.0
  %680 = vmatpush2.msra.mxu0 0.0
  %681 = vmatprep.subr.mxu0 0.0
  %682 = vmatpush2.msra.mxu0 0.0
  %683 = vmatprep.subr.mxu0 0.0
  %684 = vmatpush2.msra.mxu0 0.0
  %685 = vmatprep.mubr.f32.mxu0 0.0
  %686 = vmatmul.mubr.f32.gmra.mxu0 %v613
  %v687 = vpop.f32.mrf.mxu0
  %v688 = vadd.f32 %v617, %v687
  %v689 = vpop.f32.mrf.mxu0
  %v690 = vadd.f32 %v618, %v689
  %691 = vdwg.mxu0
  %692 = vmatprep.subr.mxu0 %v443
  %693 = vmatpush1.msra.mxu0 %v442
  %694 = vmatprep.subr.mxu0 %v439
  %695 = vmatpush1.msra.mxu0 %v438
  %696 = vmatprep.subr.mxu0 %v435
  %697 = vmatpush1.msra.mxu0 %v434
  %698 = vmatprep.subr.mxu0 %v431
  %699 = vmatpush1.msra.mxu0 %v430
  %700 = vmatprep.subr.mxu0 %v427
  %701 = vmatpush1.msra.mxu0 %v426
  %702 = vmatprep.subr.mxu0 %v423
  %703 = vmatpush1.msra.mxu0 %v422
  %704 = vmatprep.subr.mxu0 %v419
  %705 = vmatpush1.msra.mxu0 %v418
  %706 = vmatprep.subr.mxu0 %v415
  %707 = vmatpush1.msra.mxu0 %v414
  %708 = vmatprep.subr.mxu0 %v411
  %709 = vmatpush1.msra.mxu0 %v410
  %710 = vmatprep.subr.mxu0 %v407
  %711 = vmatpush1.msra.mxu0 %v406
  %712 = vmatprep.subr.mxu0 %v403
  %713 = vmatpush1.msra.mxu0 %v402
  %714 = vmatprep.subr.mxu0 %v399
  %715 = vmatpush1.msra.mxu0 %v398
  %716 = vmatprep.subr.mxu0 %v395
  %717 = vmatpush1.msra.mxu0 %v394
  %718 = vmatprep.subr.mxu0 %v391
  %719 = vmatpush1.msra.mxu0 %v390
  %720 = vmatprep.subr.mxu0 %v387
  %721 = vmatpush1.msra.mxu0 %v386
  %722 = vmatprep.subr.mxu0 %v383
  %723 = vmatpush1.msra.mxu0 %v382
  %724 = vmatprep.subr.mxu0 0.0
  %725 = vmatpush2.msra.mxu0 0.0
  %726 = vmatprep.subr.mxu0 0.0
  %727 = vmatpush2.msra.mxu0 0.0
  %728 = vmatprep.subr.mxu0 0.0
  %729 = vmatpush2.msra.mxu0 0.0
  %730 = vmatprep.subr.mxu0 0.0
  %731 = vmatpush2.msra.mxu0 0.0
  %732 = vmatprep.subr.mxu0 0.0
  %733 = vmatpush2.msra.mxu0 0.0
  %734 = vmatprep.subr.mxu0 0.0
  %735 = vmatpush2.msra.mxu0 0.0
  %736 = vmatprep.subr.mxu0 0.0
  %737 = vmatpush2.msra.mxu0 0.0
  %738 = vmatprep.subr.mxu0 0.0
  %739 = vmatpush2.msra.mxu0 0.0
  %740 = vmatprep.subr.mxu0 0.0
  %741 = vmatpush2.msra.mxu0 0.0
  %742 = vmatprep.subr.mxu0 0.0
  %743 = vmatpush2.msra.mxu0 0.0
  %744 = vmatprep.subr.mxu0 0.0
  %745 = vmatpush2.msra.mxu0 0.0
  %746 = vmatprep.subr.mxu0 0.0
  %747 = vmatpush2.msra.mxu0 0.0
  %748 = vmatprep.subr.mxu0 0.0
  %749 = vmatpush2.msra.mxu0 0.0
  %750 = vmatprep.subr.mxu0 0.0
  %751 = vmatpush2.msra.mxu0 0.0
  %752 = vmatprep.subr.mxu0 0.0
  %753 = vmatpush2.msra.mxu0 0.0
  %754 = vmatprep.subr.mxu0 0.0
  %755 = vmatpush2.msra.mxu0 0.0
  %756 = vmatprep.mubr.f32.mxu0 0.0
  %757 = vmatmul.mubr.f32.gmra.mxu0 %v613
  %v758 = vpop.f32.mrf.mxu0
  %v759 = vadd.f32 %v619, %v758
  %v760 = vpop.f32.mrf.mxu0
  %v761 = vadd.f32 %v620, %v760
  %762 = vdwg.mxu0
  %v763 = vxor.u32 %v688, 2147483648
  %v764 = vxor.u32 %v690, 2147483648
  %v765 = vxor.u32 %v759, 2147483648
  %v766 = vmul.f32 %v763, 1.442695
  %v767 = vpow.pop %v766
  %v768 = vmul.f32 %v764, 1.442695
  %v769 = vpow.pop %v768
  %v770 = vmul.f32 %v765, 1.442695
  %v771 = vpow.pop %v770
  %v772 = vadd.f32 %v767, 1.0
  %v773 = vadd.f32 %v769, 1.0
  %v774 = vadd.f32 %v771, 1.0
  %v775 = vrcp.pop %v772
  %v776 = vmul.f32 1.0, %v775
  %v777 = vrcp.pop %v773
  %v778 = vmul.f32 1.0, %v777
  %v779 = vrcp.pop %v774
  %v780 = vmul.f32 1.0, %v779
  %v781 = vtanh.pop %v761
  %v782 = vmul.f32 %v778, %v611
  %v783 = vmul.f32 %v776, %v781
  %v784 = vadd.f32 %v782, %v783
  %v785 = vtanh.pop %v784
  %v786 = vmul.f32 %v780, %v785
  %v787 = vadd.f32 %v614, %v786
  %v788 = vmax.f32 %v615, %v786
  %s789 = scalar_lea.vmem [#allocation2], 64
  %v790 = vld [vmem:[%s789] sm:$0xff]
  %v791 = vld [vmem:[%s789 + $0x8] sm:$0xff]
  %v792 = vld [vmem:[%s789 + $0x10] sm:$0xff]
  %v793 = vld [vmem:[%s789 + $0x18] sm:$0xff]
  %794 = vmatprep.subr.mxu0 %v441
  %795 = vmatpush1.msra.mxu0 %v440
  %796 = vmatprep.subr.mxu0 %v437
  %797 = vmatpush1.msra.mxu0 %v436
  %798 = vmatprep.subr.mxu0 %v433
  %799 = vmatpush1.msra.mxu0 %v432
  %800 = vmatprep.subr.mxu0 %v429
  %801 = vmatpush1.msra.mxu0 %v428
  %802 = vmatprep.subr.mxu0 %v425
  %803 = vmatpush1.msra.mxu0 %v424
  %804 = vmatprep.subr.mxu0 %v421
  %805 = vmatpush1.msra.mxu0 %v420
  %806 = vmatprep.subr.mxu0 %v417
  %807 = vmatpush1.msra.mxu0 %v416
  %808 = vmatprep.subr.mxu0 %v413
  %809 = vmatpush1.msra.mxu0 %v412
  %810 = vmatprep.subr.mxu0 %v409
  %811 = vmatpush1.msra.mxu0 %v408
  %812 = vmatprep.subr.mxu0 %v405
  %813 = vmatpush1.msra.mxu0 %v404
  %814 = vmatprep.subr.mxu0 %v401
  %815 = vmatpush1.msra.mxu0 %v400
  %816 = vmatprep.subr.mxu0 %v397
  %817 = vmatpush1.msra.mxu0 %v396
  %818 = vmatprep.subr.mxu0 %v393
  %819 = vmatpush1.msra.mxu0 %v392
  %820 = vmatprep.subr.mxu0 %v389
  %821 = vmatpush1.msra.mxu0 %v388
  %822 = vmatprep.subr.mxu0 %v385
  %823 = vmatpush1.msra.mxu0 %v384
  %824 = vmatprep.subr.mxu0 %v381
  %825 = vmatpush1.msra.mxu0 %v380
  %826 = vmatprep.subr.mxu0 0.0
  %827 = vmatpush2.msra.mxu0 0.0
  %828 = vmatprep.subr.mxu0 0.0
  %829 = vmatpush2.msra.mxu0 0.0
  %830 = vmatprep.subr.mxu0 0.0
  %831 = vmatpush2.msra.mxu0 0.0
  %832 = vmatprep.subr.mxu0 0.0
  %833 = vmatpush2.msra.mxu0 0.0
  %834 = vmatprep.subr.mxu0 0.0
  %835 = vmatpush2.msra.mxu0 0.0
  %836 = vmatprep.subr.mxu0 0.0
  %837 = vmatpush2.msra.mxu0 0.0
  %838 = vmatprep.subr.mxu0 0.0
  %839 = vmatpush2.msra.mxu0 0.0
  %840 = vmatprep.subr.mxu0 0.0
  %841 = vmatpush2.msra.mxu0 0.0
  %842 = vmatprep.subr.mxu0 0.0
  %843 = vmatpush2.msra.mxu0 0.0
  %844 = vmatprep.subr.mxu0 0.0
  %845 = vmatpush2.msra.mxu0 0.0
  %846 = vmatprep.subr.mxu0 0.0
  %847 = vmatpush2.msra.mxu0 0.0
  %848 = vmatprep.subr.mxu0 0.0
  %849 = vmatpush2.msra.mxu0 0.0
  %850 = vmatprep.subr.mxu0 0.0
  %851 = vmatpush2.msra.mxu0 0.0
  %852 = vmatprep.subr.mxu0 0.0
  %853 = vmatpush2.msra.mxu0 0.0
  %854 = vmatprep.subr.mxu0 0.0
  %855 = vmatpush2.msra.mxu0 0.0
  %856 = vmatprep.subr.mxu0 0.0
  %857 = vmatpush2.msra.mxu0 0.0
  %858 = vmatprep.mubr.f32.mxu0 0.0
  %859 = vmatmul.mubr.f32.gmra.mxu0 %v786
  %v860 = vpop.f32.mrf.mxu0
  %v861 = vadd.f32 %v790, %v860
  %v862 = vpop.f32.mrf.mxu0
  %v863 = vadd.f32 %v791, %v862
  %864 = vdwg.mxu0
  %865 = vmatprep.subr.mxu0 %v443
  %866 = vmatpush1.msra.mxu0 %v442
  %867 = vmatprep.subr.mxu0 %v439
  %868 = vmatpush1.msra.mxu0 %v438
  %869 = vmatprep.subr.mxu0 %v435
  %870 = vmatpush1.msra.mxu0 %v434
  %871 = vmatprep.subr.mxu0 %v431
  %872 = vmatpush1.msra.mxu0 %v430
  %873 = vmatprep.subr.mxu0 %v427
  %874 = vmatpush1.msra.mxu0 %v426
  %875 = vmatprep.subr.mxu0 %v423
  %876 = vmatpush1.msra.mxu0 %v422
  %877 = vmatprep.subr.mxu0 %v419
  %878 = vmatpush1.msra.mxu0 %v418
  %879 = vmatprep.subr.mxu0 %v415
  %880 = vmatpush1.msra.mxu0 %v414
  %881 = vmatprep.subr.mxu0 %v411
  %882 = vmatpush1.msra.mxu0 %v410
  %883 = vmatprep.subr.mxu0 %v407
  %884 = vmatpush1.msra.mxu0 %v406
  %885 = vmatprep.subr.mxu0 %v403
  %886 = vmatpush1.msra.mxu0 %v402
  %887 = vmatprep.subr.mxu0 %v399
  %888 = vmatpush1.msra.mxu0 %v398
  %889 = vmatprep.subr.mxu0 %v395
  %890 = vmatpush1.msra.mxu0 %v394
  %891 = vmatprep.subr.mxu0 %v391
  %892 = vmatpush1.msra.mxu0 %v390
  %893 = vmatprep.subr.mxu0 %v387
  %894 = vmatpush1.msra.mxu0 %v386
  %895 = vmatprep.subr.mxu0 %v383
  %896 = vmatpush1.msra.mxu0 %v382
  %897 = vmatprep.subr.mxu0 0.0
  %898 = vmatpush2.msra.mxu0 0.0
  %899 = vmatprep.subr.mxu0 0.0
  %900 = vmatpush2.msra.mxu0 0.0
  %901 = vmatprep.subr.mxu0 0.0
  %902 = vmatpush2.msra.mxu0 0.0
  %903 = vmatprep.subr.mxu0 0.0
  %904 = vmatpush2.msra.mxu0 0.0
  %905 = vmatprep.subr.mxu0 0.0
  %906 = vmatpush2.msra.mxu0 0.0
  %907 = vmatprep.subr.mxu0 0.0
  %908 = vmatpush2.msra.mxu0 0.0
  %909 = vmatprep.subr.mxu0 0.0
  %910 = vmatpush2.msra.mxu0 0.0
  %911 = vmatprep.subr.mxu0 0.0
  %912 = vmatpush2.msra.mxu0 0.0
  %913 = vmatprep.subr.mxu0 0.0
  %914 = vmatpush2.msra.mxu0 0.0
  %915 = vmatprep.subr.mxu0 0.0
  %916 = vmatpush2.msra.mxu0 0.0
  %917 = vmatprep.subr.mxu0 0.0
  %918 = vmatpush2.msra.mxu0 0.0
  %919 = vmatprep.subr.mxu0 0.0
  %920 = vmatpush2.msra.mxu0 0.0
  %921 = vmatprep.subr.mxu0 0.0
  %922 = vmatpush2.msra.mxu0 0.0
  %923 = vmatprep.subr.mxu0 0.0
  %924 = vmatpush2.msra.mxu0 0.0
  %925 = vmatprep.subr.mxu0 0.0
  %926 = vmatpush2.msra.mxu0 0.0
  %927 = vmatprep.subr.mxu0 0.0
  %928 = vmatpush2.msra.mxu0 0.0
  %929 = vmatprep.mubr.f32.mxu0 0.0
  %930 = vmatmul.mubr.f32.gmra.mxu0 %v786
  %v931 = vpop.f32.mrf.mxu0
  %v932 = vadd.f32 %v792, %v931
  %v933 = vpop.f32.mrf.mxu0
  %v934 = vadd.f32 %v793, %v933
  %935 = vdwg.mxu0
  %v936 = vxor.u32 %v861, 2147483648
  %v937 = vxor.u32 %v863, 2147483648
  %v938 = vxor.u32 %v932, 2147483648
  %v939 = vmul.f32 %v936, 1.442695
  %v940 = vpow.pop %v939
  %v941 = vmul.f32 %v937, 1.442695
  %v942 = vpow.pop %v941
  %v943 = vmul.f32 %v938, 1.442695
  %v944 = vpow.pop %v943
  %v945 = vadd.f32 %v940, 1.0
  %v946 = vadd.f32 %v942, 1.0
  %v947 = vadd.f32 %v944, 1.0
  %v948 = vrcp.pop %v945
  %v949 = vmul.f32 1.0, %v948
  %v950 = vrcp.pop %v946
  %v951 = vmul.f32 1.0, %v950
  %v952 = vrcp.pop %v947
  %v953 = vmul.f32 1.0, %v952
  %v954 = vtanh.pop %v934
  %v955 = vmul.f32 %v951, %v784
  %v956 = vmul.f32 %v949, %v954
  %v957 = vadd.f32 %v955, %v956
  %v958 = vtanh.pop %v957
  %v959 = vmul.f32 %v953, %v958
  %v960 = vadd.f32 %v787, %v959
  %v961 = vmax.f32 %v788, %v959
  %s962 = scalar_lea.vmem [#allocation2], 96
  %v963 = vld [vmem:[%s962] sm:$0xff]
  %v964 = vld [vmem:[%s962 + $0x8] sm:$0xff]
  %v965 = vld [vmem:[%s962 + $0x10] sm:$0xff]
  %v966 = vld [vmem:[%s962 + $0x18] sm:$0xff]
  %967 = vmatprep.subr.mxu0 %v441
  %968 = vmatpush1.msra.mxu0 %v440
  %969 = vmatprep.subr.mxu0 %v437
  %970 = vmatpush1.msra.mxu0 %v436
  %971 = vmatprep.subr.mxu0 %v433
  %972 = vmatpush1.msra.mxu0 %v432
  %973 = vmatprep.subr.mxu0 %v429
  %974 = vmatpush1.msra.mxu0 %v428
  %975 = vmatprep.subr.mxu0 %v425
  %976 = vmatpush1.msra.mxu0 %v424
  %977 = vmatprep.subr.mxu0 %v421
  %978 = vmatpush1.msra.mxu0 %v420
  %979 = vmatprep.subr.mxu0 %v417
  %980 = vmatpush1.msra.mxu0 %v416
  %981 = vmatprep.subr.mxu0 %v413
  %982 = vmatpush1.msra.mxu0 %v412
  %983 = vmatprep.subr.mxu0 %v409
  %984 = vmatpush1.msra.mxu0 %v408
  %985 = vmatprep.subr.mxu0 %v405
  %986 = vmatpush1.msra.mxu0 %v404
  %987 = vmatprep.subr.mxu0 %v401
  %988 = vmatpush1.msra.mxu0 %v400
  %989 = vmatprep.subr.mxu0 %v397
  %990 = vmatpush1.msra.mxu0 %v396
  %991 = vmatprep.subr.mxu0 %v393
  %992 = vmatpush1.msra.mxu0 %v392
  %993 = vmatprep.subr.mxu0 %v389
  %994 = vmatpush1.msra.mxu0 %v388
  %995 = vmatprep.subr.mxu0 %v385
  %996 = vmatpush1.msra.mxu0 %v384
  %997 = vmatprep.subr.mxu0 %v381
  %998 = vmatpush1.msra.mxu0 %v380
  %999 = vmatprep.subr.mxu0 0.0
  %1000 = vmatpush2.msra.mxu0 0.0
  %1001 = vmatprep.subr.mxu0 0.0
  %1002 = vmatpush2.msra.mxu0 0.0
  %1003 = vmatprep.subr.mxu0 0.0
  %1004 = vmatpush2.msra.mxu0 0.0
  %1005 = vmatprep.subr.mxu0 0.0
  %1006 = vmatpush2.msra.mxu0 0.0
  %1007 = vmatprep.subr.mxu0 0.0
  %1008 = vmatpush2.msra.mxu0 0.0
  %1009 = vmatprep.subr.mxu0 0.0
  %1010 = vmatpush2.msra.mxu0 0.0
  %1011 = vmatprep.subr.mxu0 0.0
  %1012 = vmatpush2.msra.mxu0 0.0
  %1013 = vmatprep.subr.mxu0 0.0
  %1014 = vmatpush2.msra.mxu0 0.0
  %1015 = vmatprep.subr.mxu0 0.0
  %1016 = vmatpush2.msra.mxu0 0.0
  %1017 = vmatprep.subr.mxu0 0.0
  %1018 = vmatpush2.msra.mxu0 0.0
  %1019 = vmatprep.subr.mxu0 0.0
  %1020 = vmatpush2.msra.mxu0 0.0
  %1021 = vmatprep.subr.mxu0 0.0
  %1022 = vmatpush2.msra.mxu0 0.0
  %1023 = vmatprep.subr.mxu0 0.0
  %1024 = vmatpush2.msra.mxu0 0.0
  %1025 = vmatprep.subr.mxu0 0.0
  %1026 = vmatpush2.msra.mxu0 0.0
  %1027 = vmatprep.subr.mxu0 0.0
  %1028 = vmatpush2.msra.mxu0 0.0
  %1029 = vmatprep.subr.mxu0 0.0
  %1030 = vmatpush2.msra.mxu0 0.0
  %1031 = vmatprep.mubr.f32.mxu0 0.0
  %1032 = vmatmul.mubr.f32.gmra.mxu0 %v959
  %v1033 = vpop.f32.mrf.mxu0
  %v1034 = vadd.f32 %v963, %v1033
  %v1035 = vpop.f32.mrf.mxu0
  %v1036 = vadd.f32 %v964, %v1035
  %1037 = vdwg.mxu0
  %1038 = vmatprep.subr.mxu0 %v443
  %1039 = vmatpush1.msra.mxu0 %v442
  %1040 = vmatprep.subr.mxu0 %v439
  %1041 = vmatpush1.msra.mxu0 %v438
  %1042 = vmatprep.subr.mxu0 %v435
  %1043 = vmatpush1.msra.mxu0 %v434
  %1044 = vmatprep.subr.mxu0 %v431
  %1045 = vmatpush1.msra.mxu0 %v430
  %1046 = vmatprep.subr.mxu0 %v427
  %1047 = vmatpush1.msra.mxu0 %v426
  %1048 = vmatprep.subr.mxu0 %v423
  %1049 = vmatpush1.msra.mxu0 %v422
  %1050 = vmatprep.subr.mxu0 %v419
  %1051 = vmatpush1.msra.mxu0 %v418
  %1052 = vmatprep.subr.mxu0 %v415
  %1053 = vmatpush1.msra.mxu0 %v414
  %1054 = vmatprep.subr.mxu0 %v411
  %1055 = vmatpush1.msra.mxu0 %v410
  %1056 = vmatprep.subr.mxu0 %v407
  %1057 = vmatpush1.msra.mxu0 %v406
  %1058 = vmatprep.subr.mxu0 %v403
  %1059 = vmatpush1.msra.mxu0 %v402
  %1060 = vmatprep.subr.mxu0 %v399
  %1061 = vmatpush1.msra.mxu0 %v398
  %1062 = vmatprep.subr.mxu0 %v395
  %1063 = vmatpush1.msra.mxu0 %v394
  %1064 = vmatprep.subr.mxu0 %v391
  %1065 = vmatpush1.msra.mxu0 %v390
  %1066 = vmatprep.subr.mxu0 %v387
  %1067 = vmatpush1.msra.mxu0 %v386
  %1068 = vmatprep.subr.mxu0 %v383
  %1069 = vmatpush1.msra.mxu0 %v382
  %1070 = vmatprep.subr.mxu0 0.0
  %1071 = vmatpush2.msra.mxu0 0.0
  %1072 = vmatprep.subr.mxu0 0.0
  %1073 = vmatpush2.msra.mxu0 0.0
  %1074 = vmatprep.subr.mxu0 0.0
  %1075 = vmatpush2.msra.mxu0 0.0
  %1076 = vmatprep.subr.mxu0 0.0
  %1077 = vmatpush2.msra.mxu0 0.0
  %1078 = vmatprep.subr.mxu0 0.0
  %1079 = vmatpush2.msra.mxu0 0.0
  %1080 = vmatprep.subr.mxu0 0.0
  %1081 = vmatpush2.msra.mxu0 0.0
  %1082 = vmatprep.subr.mxu0 0.0
  %1083 = vmatpush2.msra.mxu0 0.0
  %1084 = vmatprep.subr.mxu0 0.0
  %1085 = vmatpush2.msra.mxu0 0.0
  %1086 = vmatprep.subr.mxu0 0.0
  %1087 = vmatpush2.msra.mxu0 0.0
  %1088 = vmatprep.subr.mxu0 0.0
  %1089 = vmatpush2.msra.mxu0 0.0
  %1090 = vmatprep.subr.mxu0 0.0
  %1091 = vmatpush2.msra.mxu0 0.0
  %1092 = vmatprep.subr.mxu0 0.0
  %1093 = vmatpush2.msra.mxu0 0.0
  %1094 = vmatprep.subr.mxu0 0.0
  %1095 = vmatpush2.msra.mxu0 0.0
  %1096 = vmatprep.subr.mxu0 0.0
  %1097 = vmatpush2.msra.mxu0 0.0
  %1098 = vmatprep.subr.mxu0 0.0
  %1099 = vmatpush2.msra.mxu0 0.0
  %1100 = vmatprep.subr.mxu0 0.0
  %1101 = vmatpush2.msra.mxu0 0.0
  %1102 = vmatprep.mubr.f32.mxu0 0.0
  %1103 = vmatmul.mubr.f32.gmra.mxu0 %v959
  %v1104 = vpop.f32.mrf.mxu0
  %v1105 = vadd.f32 %v965, %v1104
  %v1106 = vpop.f32.mrf.mxu0
  %v1107 = vadd.f32 %v966, %v1106
  %1108 = vdwg.mxu0
  %v1109 = vxor.u32 %v1034, 2147483648
  %v1110 = vxor.u32 %v1036, 2147483648
  %v1111 = vxor.u32 %v1105, 2147483648
  %v1112 = vmul.f32 %v1109, 1.442695
  %v1113 = vpow.pop %v1112
  %v1114 = vmul.f32 %v1110, 1.442695
  %v1115 = vpow.pop %v1114
  %v1116 = vmul.f32 %v1111, 1.442695
  %v1117 = vpow.pop %v1116
  %v1118 = vadd.f32 %v1113, 1.0
  %v1119 = vadd.f32 %v1115, 1.0
  %v1120 = vadd.f32 %v1117, 1.0
  %v1121 = vrcp.pop %v1118
  %v1122 = vmul.f32 1.0, %v1121
  %v1123 = vrcp.pop %v1119
  %v1124 = vmul.f32 1.0, %v1123
  %v1125 = vrcp.pop %v1120
  %v1126 = vmul.f32 1.0, %v1125
  %v1127 = vtanh.pop %v1107
  %v1128 = vmul.f32 %v1124, %v957
  %v1129 = vmul.f32 %v1122, %v1127
  %v1130 = vadd.f32 %v1128, %v1129
  %v1131 = vtanh.pop %v1130
  %v1132 = vmul.f32 %v1126, %v1131
  %v1133 = vadd.f32 %v960, %v1132
  %v1134 = vmax.f32 %v961, %v1132
  %s1135 = scalar_lea.vmem [#allocation2], 128
  %v1136 = vld [vmem:[%s1135] sm:$0xff]
  %v1137 = vld [vmem:[%s1135 + $0x8] sm:$0xff]
  %v1138 = vld [vmem:[%s1135 + $0x10] sm:$0xff]
  %v1139 = vld [vmem:[%s1135 + $0x18] sm:$0xff]
  %1140 = vmatprep.subr.mxu0 %v441
  %1141 = vmatpush1.msra.mxu0 %v440
  %1142 = vmatprep.subr.mxu0 %v437
  %1143 = vmatpush1.msra.mxu0 %v436
  %1144 = vmatprep.subr.mxu0 %v433
  %1145 = vmatpush1.msra.mxu0 %v432
  %1146 = vmatprep.subr.mxu0 %v429
  %1147 = vmatpush1.msra.mxu0 %v428
  %1148 = vmatprep.subr.mxu0 %v425
  %1149 = vmatpush1.msra.mxu0 %v424
  %1150 = vmatprep.subr.mxu0 %v421
  %1151 = vmatpush1.msra.mxu0 %v420
  %1152 = vmatprep.subr.mxu0 %v417
  %1153 = vmatpush1.msra.mxu0 %v416
  %1154 = vmatprep.subr.mxu0 %v413
  %1155 = vmatpush1.msra.mxu0 %v412
  %1156 = vmatprep.subr.mxu0 %v409
  %1157 = vmatpush1.msra.mxu0 %v408
  %1158 = vmatprep.subr.mxu0 %v405
  %1159 = vmatpush1.msra.mxu0 %v404
  %1160 = vmatprep.subr.mxu0 %v401
  %1161 = vmatpush1.msra.mxu0 %v400
  %1162 = vmatprep.subr.mxu0 %v397
  %1163 = vmatpush1.msra.mxu0 %v396
  %1164 = vmatprep.subr.mxu0 %v393
  %1165 = vmatpush1.msra.mxu0 %v392
  %1166 = vmatprep.subr.mxu0 %v389
  %1167 = vmatpush1.msra.mxu0 %v388
  %1168 = vmatprep.subr.mxu0 %v385
  %1169 = vmatpush1.msra.mxu0 %v384
  %1170 = vmatprep.subr.mxu0 %v381
  %1171 = vmatpush1.msra.mxu0 %v380
  %1172 = vmatprep.subr.mxu0 0.0
  %1173 = vmatpush2.msra.mxu0 0.0
  %1174 = vmatprep.subr.mxu0 0.0
  %1175 = vmatpush2.msra.mxu0 0.0
  %1176 = vmatprep.subr.mxu0 0.0
  %1177 = vmatpush2.msra.mxu0 0.0
  %1178 = vmatprep.subr.mxu0 0.0
  %1179 = vmatpush2.msra.mxu0 0.0
  %1180 = vmatprep.subr.mxu0 0.0
  %1181 = vmatpush2.msra.mxu0 0.0
  %1182 = vmatprep.subr.mxu0 0.0
  %1183 = vmatpush2.msra.mxu0 0.0
  %1184 = vmatprep.subr.mxu0 0.0
  %1185 = vmatpush2.msra.mxu0 0.0
  %1186 = vmatprep.subr.mxu0 0.0
  %1187 = vmatpush2.msra.mxu0 0.0
  %1188 = vmatprep.subr.mxu0 0.0
  %1189 = vmatpush2.msra.mxu0 0.0
  %1190 = vmatprep.subr.mxu0 0.0
  %1191 = vmatpush2.msra.mxu0 0.0
  %1192 = vmatprep.subr.mxu0 0.0
  %1193 = vmatpush2.msra.mxu0 0.0
  %1194 = vmatprep.subr.mxu0 0.0
  %1195 = vmatpush2.msra.mxu0 0.0
  %1196 = vmatprep.subr.mxu0 0.0
  %1197 = vmatpush2.msra.mxu0 0.0
  %1198 = vmatprep.subr.mxu0 0.0
  %1199 = vmatpush2.msra.mxu0 0.0
  %1200 = vmatprep.subr.mxu0 0.0
  %1201 = vmatpush2.msra.mxu0 0.0
  %1202 = vmatprep.subr.mxu0 0.0
  %1203 = vmatpush2.msra.mxu0 0.0
  %1204 = vmatprep.mubr.f32.mxu0 0.0
  %1205 = vmatmul.mubr.f32.gmra.mxu0 %v1132
  %v1206 = vpop.f32.mrf.mxu0
  %v1207 = vadd.f32 %v1136, %v1206
  %v1208 = vpop.f32.mrf.mxu0
  %v1209 = vadd.f32 %v1137, %v1208
  %1210 = vdwg.mxu0
  %1211 = vmatprep.subr.mxu0 %v443
  %1212 = vmatpush1.msra.mxu0 %v442
  %1213 = vmatprep.subr.mxu0 %v439
  %1214 = vmatpush1.msra.mxu0 %v438
  %1215 = vmatprep.subr.mxu0 %v435
  %1216 = vmatpush1.msra.mxu0 %v434
  %1217 = vmatprep.subr.mxu0 %v431
  %1218 = vmatpush1.msra.mxu0 %v430
  %1219 = vmatprep.subr.mxu0 %v427
  %1220 = vmatpush1.msra.mxu0 %v426
  %1221 = vmatprep.subr.mxu0 %v423
  %1222 = vmatpush1.msra.mxu0 %v422
  %1223 = vmatprep.subr.mxu0 %v419
  %1224 = vmatpush1.msra.mxu0 %v418
  %1225 = vmatprep.subr.mxu0 %v415
  %1226 = vmatpush1.msra.mxu0 %v414
  %1227 = vmatprep.subr.mxu0 %v411
  %1228 = vmatpush1.msra.mxu0 %v410
  %1229 = vmatprep.subr.mxu0 %v407
  %1230 = vmatpush1.msra.mxu0 %v406
  %1231 = vmatprep.subr.mxu0 %v403
  %1232 = vmatpush1.msra.mxu0 %v402
  %1233 = vmatprep.subr.mxu0 %v399
  %1234 = vmatpush1.msra.mxu0 %v398
  %1235 = vmatprep.subr.mxu0 %v395
  %1236 = vmatpush1.msra.mxu0 %v394
  %1237 = vmatprep.subr.mxu0 %v391
  %1238 = vmatpush1.msra.mxu0 %v390
  %1239 = vmatprep.subr.mxu0 %v387
  %1240 = vmatpush1.msra.mxu0 %v386
  %1241 = vmatprep.subr.mxu0 %v383
  %1242 = vmatpush1.msra.mxu0 %v382
  %1243 = vmatprep.subr.mxu0 0.0
  %1244 = vmatpush2.msra.mxu0 0.0
  %1245 = vmatprep.subr.mxu0 0.0
  %1246 = vmatpush2.msra.mxu0 0.0
  %1247 = vmatprep.subr.mxu0 0.0
  %1248 = vmatpush2.msra.mxu0 0.0
  %1249 = vmatprep.subr.mxu0 0.0
  %1250 = vmatpush2.msra.mxu0 0.0
  %1251 = vmatprep.subr.mxu0 0.0
  %1252 = vmatpush2.msra.mxu0 0.0
  %1253 = vmatprep.subr.mxu0 0.0
  %1254 = vmatpush2.msra.mxu0 0.0
  %1255 = vmatprep.subr.mxu0 0.0
  %1256 = vmatpush2.msra.mxu0 0.0
  %1257 = vmatprep.subr.mxu0 0.0
  %1258 = vmatpush2.msra.mxu0 0.0
  %1259 = vmatprep.subr.mxu0 0.0
  %1260 = vmatpush2.msra.mxu0 0.0
  %1261 = vmatprep.subr.mxu0 0.0
  %1262 = vmatpush2.msra.mxu0 0.0
  %1263 = vmatprep.subr.mxu0 0.0
  %1264 = vmatpush2.msra.mxu0 0.0
  %1265 = vmatprep.subr.mxu0 0.0
  %1266 = vmatpush2.msra.mxu0 0.0
  %1267 = vmatprep.subr.mxu0 0.0
  %1268 = vmatpush2.msra.mxu0 0.0
  %1269 = vmatprep.subr.mxu0 0.0
  %1270 = vmatpush2.msra.mxu0 0.0
  %1271 = vmatprep.subr.mxu0 0.0
  %1272 = vmatpush2.msra.mxu0 0.0
  %1273 = vmatprep.subr.mxu0 0.0
  %1274 = vmatpush2.msra.mxu0 0.0
  %1275 = vmatprep.mubr.f32.mxu0 0.0
  %1276 = vmatmul.mubr.f32.gmra.mxu0 %v1132
  %v1277 = vpop.f32.mrf.mxu0
  %v1278 = vadd.f32 %v1138, %v1277
  %v1279 = vpop.f32.mrf.mxu0
  %v1280 = vadd.f32 %v1139, %v1279
  %1281 = vdwg.mxu0
  %v1282 = vxor.u32 %v1207, 2147483648
  %v1283 = vxor.u32 %v1209, 2147483648
  %v1284 = vxor.u32 %v1278, 2147483648
  %v1285 = vmul.f32 %v1282, 1.442695
  %v1286 = vpow.pop %v1285
  %v1287 = vmul.f32 %v1283, 1.442695
  %v1288 = vpow.pop %v1287
  %v1289 = vmul.f32 %v1284, 1.442695
  %v1290 = vpow.pop %v1289
  %v1291 = vadd.f32 %v1286, 1.0
  %v1292 = vadd.f32 %v1288, 1.0
  %v1293 = vadd.f32 %v1290, 1.0
  %v1294 = vrcp.pop %v1291
  %v1295 = vmul.f32 1.0, %v1294
  %v1296 = vrcp.pop %v1292
  %v1297 = vmul.f32 1.0, %v1296
  %v1298 = vrcp.pop %v1293
  %v1299 = vmul.f32 1.0, %v1298
  %v1300 = vtanh.pop %v1280
  %v1301 = vmul.f32 %v1297, %v1130
  %v1302 = vmul.f32 %v1295, %v1300
  %v1303 = vadd.f32 %v1301, %v1302
  %v1304 = vtanh.pop %v1303
  %v1305 = vmul.f32 %v1299, %v1304
  %v1306 = vadd.f32 %v1133, %v1305
  %v1307 = vmax.f32 %v1134, %v1305
  %s1308 = scalar_lea.vmem [#allocation2], 160
  %v1309 = vld [vmem:[%s1308] sm:$0xff]
  %v1310 = vld [vmem:[%s1308 + $0x8] sm:$0xff]
  %v1311 = vld [vmem:[%s1308 + $0x10] sm:$0xff]
  %v1312 = vld [vmem:[%s1308 + $0x18] sm:$0xff]
  %1313 = vmatprep.subr.mxu0 %v441
  %1314 = vmatpush1.msra.mxu0 %v440
  %1315 = vmatprep.subr.mxu0 %v437
  %1316 = vmatpush1.msra.mxu0 %v436
  %1317 = vmatprep.subr.mxu0 %v433
  %1318 = vmatpush1.msra.mxu0 %v432
  %1319 = vmatprep.subr.mxu0 %v429
  %1320 = vmatpush1.msra.mxu0 %v428
  %1321 = vmatprep.subr.mxu0 %v425
  %1322 = vmatpush1.msra.mxu0 %v424
  %1323 = vmatprep.subr.mxu0 %v421
  %1324 = vmatpush1.msra.mxu0 %v420
  %1325 = vmatprep.subr.mxu0 %v417
  %1326 = vmatpush1.msra.mxu0 %v416
  %1327 = vmatprep.subr.mxu0 %v413
  %1328 = vmatpush1.msra.mxu0 %v412
  %1329 = vmatprep.subr.mxu0 %v409
  %1330 = vmatpush1.msra.mxu0 %v408
  %1331 = vmatprep.subr.mxu0 %v405
  %1332 = vmatpush1.msra.mxu0 %v404
  %1333 = vmatprep.subr.mxu0 %v401
  %1334 = vmatpush1.msra.mxu0 %v400
  %1335 = vmatprep.subr.mxu0 %v397
  %1336 = vmatpush1.msra.mxu0 %v396
  %1337 = vmatprep.subr.mxu0 %v393
  %1338 = vmatpush1.msra.mxu0 %v392
  %1339 = vmatprep.subr.mxu0 %v389
  %1340 = vmatpush1.msra.mxu0 %v388
  %1341 = vmatprep.subr.mxu0 %v385
  %1342 = vmatpush1.msra.mxu0 %v384
  %1343 = vmatprep.subr.mxu0 %v381
  %1344 = vmatpush1.msra.mxu0 %v380
  %1345 = vmatprep.subr.mxu0 0.0
  %1346 = vmatpush2.msra.mxu0 0.0
  %1347 = vmatprep.subr.mxu0 0.0
  %1348 = vmatpush2.msra.mxu0 0.0
  %1349 = vmatprep.subr.mxu0 0.0
  %1350 = vmatpush2.msra.mxu0 0.0
  %1351 = vmatprep.subr.mxu0 0.0
  %1352 = vmatpush2.msra.mxu0 0.0
  %1353 = vmatprep.subr.mxu0 0.0
  %1354 = vmatpush2.msra.mxu0 0.0
  %1355 = vmatprep.subr.mxu0 0.0
  %1356 = vmatpush2.msra.mxu0 0.0
  %1357 = vmatprep.subr.mxu0 0.0
  %1358 = vmatpush2.msra.mxu0 0.0
  %1359 = vmatprep.subr.mxu0 0.0
  %1360 = vmatpush2.msra.mxu0 0.0
  %1361 = vmatprep.subr.mxu0 0.0
  %1362 = vmatpush2.msra.mxu0 0.0
  %1363 = vmatprep.subr.mxu0 0.0
  %1364 = vmatpush2.msra.mxu0 0.0
  %1365 = vmatprep.subr.mxu0 0.0
  %1366 = vmatpush2.msra.mxu0 0.0
  %1367 = vmatprep.subr.mxu0 0.0
  %1368 = vmatpush2.msra.mxu0 0.0
  %1369 = vmatprep.subr.mxu0 0.0
  %1370 = vmatpush2.msra.mxu0 0.0
  %1371 = vmatprep.subr.mxu0 0.0
  %1372 = vmatpush2.msra.mxu0 0.0
  %1373 = vmatprep.subr.mxu0 0.0
  %1374 = vmatpush2.msra.mxu0 0.0
  %1375 = vmatprep.subr.mxu0 0.0
  %1376 = vmatpush2.msra.mxu0 0.0
  %1377 = vmatprep.mubr.f32.mxu0 0.0
  %1378 = vmatmul.mubr.f32.gmra.mxu0 %v1305
  %v1379 = vpop.f32.mrf.mxu0
  %v1380 = vadd.f32 %v1309, %v1379
  %v1381 = vpop.f32.mrf.mxu0
  %v1382 = vadd.f32 %v1310, %v1381
  %1383 = vdwg.mxu0
  %1384 = vmatprep.subr.mxu0 %v443
  %1385 = vmatpush1.msra.mxu0 %v442
  %1386 = vmatprep.subr.mxu0 %v439
  %1387 = vmatpush1.msra.mxu0 %v438
  %1388 = vmatprep.subr.mxu0 %v435
  %1389 = vmatpush1.msra.mxu0 %v434
  %1390 = vmatprep.subr.mxu0 %v431
  %1391 = vmatpush1.msra.mxu0 %v430
  %1392 = vmatprep.subr.mxu0 %v427
  %1393 = vmatpush1.msra.mxu0 %v426
  %1394 = vmatprep.subr.mxu0 %v423
  %1395 = vmatpush1.msra.mxu0 %v422
  %1396 = vmatprep.subr.mxu0 %v419
  %1397 = vmatpush1.msra.mxu0 %v418
  %1398 = vmatprep.subr.mxu0 %v415
  %1399 = vmatpush1.msra.mxu0 %v414
  %1400 = vmatprep.subr.mxu0 %v411
  %1401 = vmatpush1.msra.mxu0 %v410
  %1402 = vmatprep.subr.mxu0 %v407
  %1403 = vmatpush1.msra.mxu0 %v406
  %1404 = vmatprep.subr.mxu0 %v403
  %1405 = vmatpush1.msra.mxu0 %v402
  %1406 = vmatprep.subr.mxu0 %v399
  %1407 = vmatpush1.msra.mxu0 %v398
  %1408 = vmatprep.subr.mxu0 %v395
  %1409 = vmatpush1.msra.mxu0 %v394
  %1410 = vmatprep.subr.mxu0 %v391
  %1411 = vmatpush1.msra.mxu0 %v390
  %1412 = vmatprep.subr.mxu0 %v387
  %1413 = vmatpush1.msra.mxu0 %v386
  %1414 = vmatprep.subr.mxu0 %v383
  %1415 = vmatpush1.msra.mxu0 %v382
  %1416 = vmatprep.subr.mxu0 0.0
  %1417 = vmatpush2.msra.mxu0 0.0
  %1418 = vmatprep.subr.mxu0 0.0
  %1419 = vmatpush2.msra.mxu0 0.0
  %1420 = vmatprep.subr.mxu0 0.0
  %1421 = vmatpush2.msra.mxu0 0.0
  %1422 = vmatprep.subr.mxu0 0.0
  %1423 = vmatpush2.msra.mxu0 0.0
  %1424 = vmatprep.subr.mxu0 0.0
  %1425 = vmatpush2.msra.mxu0 0.0
  %1426 = vmatprep.subr.mxu0 0.0
  %1427 = vmatpush2.msra.mxu0 0.0
  %1428 = vmatprep.subr.mxu0 0.0
  %1429 = vmatpush2.msra.mxu0 0.0
  %1430 = vmatprep.subr.mxu0 0.0
  %1431 = vmatpush2.msra.mxu0 0.0
  %1432 = vmatprep.subr.mxu0 0.0
  %1433 = vmatpush2.msra.mxu0 0.0
  %1434 = vmatprep.subr.mxu0 0.0
  %1435 = vmatpush2.msra.mxu0 0.0
  %1436 = vmatprep.subr.mxu0 0.0
  %1437 = vmatpush2.msra.mxu0 0.0
  %1438 = vmatprep.subr.mxu0 0.0
  %1439 = vmatpush2.msra.mxu0 0.0
  %1440 = vmatprep.subr.mxu0 0.0
  %1441 = vmatpush2.msra.mxu0 0.0
  %1442 = vmatprep.subr.mxu0 0.0
  %1443 = vmatpush2.msra.mxu0 0.0
  %1444 = vmatprep.subr.mxu0 0.0
  %1445 = vmatpush2.msra.mxu0 0.0
  %1446 = vmatprep.subr.mxu0 0.0
  %1447 = vmatpush2.msra.mxu0 0.0
  %1448 = vmatprep.mubr.f32.mxu0 0.0
  %1449 = vmatmul.mubr.f32.gmra.mxu0 %v1305
  %v1450 = vpop.f32.mrf.mxu0
  %v1451 = vadd.f32 %v1311, %v1450
  %v1452 = vpop.f32.mrf.mxu0
  %v1453 = vadd.f32 %v1312, %v1452
  %1454 = vdwg.mxu0
  %v1455 = vxor.u32 %v1380, 2147483648
  %v1456 = vxor.u32 %v1382, 2147483648
  %v1457 = vxor.u32 %v1451, 2147483648
  %v1458 = vmul.f32 %v1455, 1.442695
  %v1459 = vpow.pop %v1458
  %v1460 = vmul.f32 %v1456, 1.442695
  %v1461 = vpow.pop %v1460
  %v1462 = vmul.f32 %v1457, 1.442695
  %v1463 = vpow.pop %v1462
  %v1464 = vadd.f32 %v1459, 1.0
  %v1465 = vadd.f32 %v1461, 1.0
  %v1466 = vadd.f32 %v1463, 1.0
  %v1467 = vrcp.pop %v1464
  %v1468 = vmul.f32 1.0, %v1467
  %v1469 = vrcp.pop %v1465
  %v1470 = vmul.f32 1.0, %v1469
  %v1471 = vrcp.pop %v1466
  %v1472 = vmul.f32 1.0, %v1471
  %v1473 = vtanh.pop %v1453
  %v1474 = vmul.f32 %v1470, %v1303
  %v1475 = vmul.f32 %v1468, %v1473
  %v1476 = vadd.f32 %v1474, %v1475
  %v1477 = vtanh.pop %v1476
  %v1478 = vmul.f32 %v1472, %v1477
  %v1479 = vadd.f32 %v1306, %v1478
  %v1480 = vmax.f32 %v1307, %v1478
  %s1481 = scalar_lea.vmem [#allocation2], 192
  %v1482 = vld [vmem:[%s1481] sm:$0xff]
  %v1483 = vld [vmem:[%s1481 + $0x8] sm:$0xff]
  %v1484 = vld [vmem:[%s1481 + $0x10] sm:$0xff]
  %v1485 = vld [vmem:[%s1481 + $0x18] sm:$0xff]
  %1486 = vmatprep.subr.mxu0 %v441
  %1487 = vmatpush1.msra.mxu0 %v440
  %1488 = vmatprep.subr.mxu0 %v437
  %1489 = vmatpush1.msra.mxu0 %v436
  %1490 = vmatprep.subr.mxu0 %v433
  %1491 = vmatpush1.msra.mxu0 %v432
  %1492 = vmatprep.subr.mxu0 %v429
  %1493 = vmatpush1.msra.mxu0 %v428
  %1494 = vmatprep.subr.mxu0 %v425
  %1495 = vmatpush1.msra.mxu0 %v424
  %1496 = vmatprep.subr.mxu0 %v421
  %1497 = vmatpush1.msra.mxu0 %v420
  %1498 = vmatprep.subr.mxu0 %v417
  %1499 = vmatpush1.msra.mxu0 %v416
  %1500 = vmatprep.subr.mxu0 %v413
  %1501 = vmatpush1.msra.mxu0 %v412
  %1502 = vmatprep.subr.mxu0 %v409
  %1503 = vmatpush1.msra.mxu0 %v408
  %1504 = vmatprep.subr.mxu0 %v405
  %1505 = vmatpush1.msra.mxu0 %v404
  %1506 = vmatprep.subr.mxu0 %v401
  %1507 = vmatpush1.msra.mxu0 %v400
  %1508 = vmatprep.subr.mxu0 %v397
  %1509 = vmatpush1.msra.mxu0 %v396
  %1510 = vmatprep.subr.mxu0 %v393
  %1511 = vmatpush1.msra.mxu0 %v392
  %1512 = vmatprep.subr.mxu0 %v389
  %1513 = vmatpush1.msra.mxu0 %v388
  %1514 = vmatprep.subr.mxu0 %v385
  %1515 = vmatpush1.msra.mxu0 %v384
  %1516 = vmatprep.subr.mxu0 %v381
  %1517 = vmatpush1.msra.mxu0 %v380
  %1518 = vmatprep.subr.mxu0 0.0
  %1519 = vmatpush2.msra.mxu0 0.0
  %1520 = vmatprep.subr.mxu0 0.0
  %1521 = vmatpush2.msra.mxu0 0.0
  %1522 = vmatprep.subr.mxu0 0.0
  %1523 = vmatpush2.msra.mxu0 0.0
  %1524 = vmatprep.subr.mxu0 0.0
  %1525 = vmatpush2.msra.mxu0 0.0
  %1526 = vmatprep.subr.mxu0 0.0
  %1527 = vmatpush2.msra.mxu0 0.0
  %1528 = vmatprep.subr.mxu0 0.0
  %1529 = vmatpush2.msra.mxu0 0.0
  %1530 = vmatprep.subr.mxu0 0.0
  %1531 = vmatpush2.msra.mxu0 0.0
  %1532 = vmatprep.subr.mxu0 0.0
  %1533 = vmatpush2.msra.mxu0 0.0
  %1534 = vmatprep.subr.mxu0 0.0
  %1535 = vmatpush2.msra.mxu0 0.0
  %1536 = vmatprep.subr.mxu0 0.0
  %1537 = vmatpush2.msra.mxu0 0.0
  %1538 = vmatprep.subr.mxu0 0.0
  %1539 = vmatpush2.msra.mxu0 0.0
  %1540 = vmatprep.subr.mxu0 0.0
  %1541 = vmatpush2.msra.mxu0 0.0
  %1542 = vmatprep.subr.mxu0 0.0
  %1543 = vmatpush2.msra.mxu0 0.0
  %1544 = vmatprep.subr.mxu0 0.0
  %1545 = vmatpush2.msra.mxu0 0.0
  %1546 = vmatprep.subr.mxu0 0.0
  %1547 = vmatpush2.msra.mxu0 0.0
  %1548 = vmatprep.subr.mxu0 0.0
  %1549 = vmatpush2.msra.mxu0 0.0
  %1550 = vmatprep.mubr.f32.mxu0 0.0
  %1551 = vmatmul.mubr.f32.gmra.mxu0 %v1478
  %v1552 = vpop.f32.mrf.mxu0
  %v1553 = vadd.f32 %v1482, %v1552
  %v1554 = vpop.f32.mrf.mxu0
  %v1555 = vadd.f32 %v1483, %v1554
  %1556 = vdwg.mxu0
  %1557 = vmatprep.subr.mxu0 %v443
  %1558 = vmatpush1.msra.mxu0 %v442
  %1559 = vmatprep.subr.mxu0 %v439
  %1560 = vmatpush1.msra.mxu0 %v438
  %1561 = vmatprep.subr.mxu0 %v435
  %1562 = vmatpush1.msra.mxu0 %v434
  %1563 = vmatprep.subr.mxu0 %v431
  %1564 = vmatpush1.msra.mxu0 %v430
  %1565 = vmatprep.subr.mxu0 %v427
  %1566 = vmatpush1.msra.mxu0 %v426
  %1567 = vmatprep.subr.mxu0 %v423
  %1568 = vmatpush1.msra.mxu0 %v422
  %1569 = vmatprep.subr.mxu0 %v419
  %1570 = vmatpush1.msra.mxu0 %v418
  %1571 = vmatprep.subr.mxu0 %v415
  %1572 = vmatpush1.msra.mxu0 %v414
  %1573 = vmatprep.subr.mxu0 %v411
  %1574 = vmatpush1.msra.mxu0 %v410
  %1575 = vmatprep.subr.mxu0 %v407
  %1576 = vmatpush1.msra.mxu0 %v406
  %1577 = vmatprep.subr.mxu0 %v403
  %1578 = vmatpush1.msra.mxu0 %v402
  %1579 = vmatprep.subr.mxu0 %v399
  %1580 = vmatpush1.msra.mxu0 %v398
  %1581 = vmatprep.subr.mxu0 %v395
  %1582 = vmatpush1.msra.mxu0 %v394
  %1583 = vmatprep.subr.mxu0 %v391
  %1584 = vmatpush1.msra.mxu0 %v390
  %1585 = vmatprep.subr.mxu0 %v387
  %1586 = vmatpush1.msra.mxu0 %v386
  %1587 = vmatprep.subr.mxu0 %v383
  %1588 = vmatpush1.msra.mxu0 %v382
  %1589 = vmatprep.subr.mxu0 0.0
  %1590 = vmatpush2.msra.mxu0 0.0
  %1591 = vmatprep.subr.mxu0 0.0
  %1592 = vmatpush2.msra.mxu0 0.0
  %1593 = vmatprep.subr.mxu0 0.0
  %1594 = vmatpush2.msra.mxu0 0.0
  %1595 = vmatprep.subr.mxu0 0.0
  %1596 = vmatpush2.msra.mxu0 0.0
  %1597 = vmatprep.subr.mxu0 0.0
  %1598 = vmatpush2.msra.mxu0 0.0
  %1599 = vmatprep.subr.mxu0 0.0
  %1600 = vmatpush2.msra.mxu0 0.0
  %1601 = vmatprep.subr.mxu0 0.0
  %1602 = vmatpush2.msra.mxu0 0.0
  %1603 = vmatprep.subr.mxu0 0.0
  %1604 = vmatpush2.msra.mxu0 0.0
  %1605 = vmatprep.subr.mxu0 0.0
  %1606 = vmatpush2.msra.mxu0 0.0
  %1607 = vmatprep.subr.mxu0 0.0
  %1608 = vmatpush2.msra.mxu0 0.0
  %1609 = vmatprep.subr.mxu0 0.0
  %1610 = vmatpush2.msra.mxu0 0.0
  %1611 = vmatprep.subr.mxu0 0.0
  %1612 = vmatpush2.msra.mxu0 0.0
  %1613 = vmatprep.subr.mxu0 0.0
  %1614 = vmatpush2.msra.mxu0 0.0
  %1615 = vmatprep.subr.mxu0 0.0
  %1616 = vmatpush2.msra.mxu0 0.0
  %1617 = vmatprep.subr.mxu0 0.0
  %1618 = vmatpush2.msra.mxu0 0.0
  %1619 = vmatprep.subr.mxu0 0.0
  %1620 = vmatpush2.msra.mxu0 0.0
  %1621 = vmatprep.mubr.f32.mxu0 0.0
  %1622 = vmatmul.mubr.f32.gmra.mxu0 %v1478
  %v1623 = vpop.f32.mrf.mxu0
  %v1624 = vadd.f32 %v1484, %v1623
  %v1625 = vpop.f32.mrf.mxu0
  %v1626 = vadd.f32 %v1485, %v1625
  %1627 = vdwg.mxu0
  %v1628 = vxor.u32 %v1553, 2147483648
  %v1629 = vxor.u32 %v1555, 2147483648
  %v1630 = vxor.u32 %v1624, 2147483648
  %v1631 = vmul.f32 %v1628, 1.442695
  %v1632 = vpow.pop %v1631
  %v1633 = vmul.f32 %v1629, 1.442695
  %v1634 = vpow.pop %v1633
  %v1635 = vmul.f32 %v1630, 1.442695
  %v1636 = vpow.pop %v1635
  %v1637 = vadd.f32 %v1632, 1.0
  %v1638 = vadd.f32 %v1634, 1.0
  %v1639 = vadd.f32 %v1636, 1.0
  %v1640 = vrcp.pop %v1637
  %v1641 = vmul.f32 1.0, %v1640
  %v1642 = vrcp.pop %v1638
  %v1643 = vmul.f32 1.0, %v1642
  %v1644 = vrcp.pop %v1639
  %v1645 = vmul.f32 1.0, %v1644
  %v1646 = vtanh.pop %v1626
  %v1647 = vmul.f32 %v1643, %v1476
  %v1648 = vmul.f32 %v1641, %v1646
  %v1649 = vadd.f32 %v1647, %v1648
  %v1650 = vtanh.pop %v1649
  %v1651 = vmul.f32 %v1645, %v1650
  %v1652 = vadd.f32 %v1479, %v1651
  %v1653 = vmax.f32 %v1480, %v1651
  %s1654 = scalar_lea.vmem [#allocation2], 224
  %v1655 = vld [vmem:[%s1654] sm:$0xff]
  %v1656 = vld [vmem:[%s1654 + $0x8] sm:$0xff]
  %v1657 = vld [vmem:[%s1654 + $0x10] sm:$0xff]
  %v1658 = vld [vmem:[%s1654 + $0x18] sm:$0xff]
  %1659 = vmatprep.subr.mxu0 %v441
  %1660 = vmatpush1.msra.mxu0 %v440
  %1661 = vmatprep.subr.mxu0 %v437
  %1662 = vmatpush1.msra.mxu0 %v436
  %1663 = vmatprep.subr.mxu0 %v433
  %1664 = vmatpush1.msra.mxu0 %v432
  %1665 = vmatprep.subr.mxu0 %v429
  %1666 = vmatpush1.msra.mxu0 %v428
  %1667 = vmatprep.subr.mxu0 %v425
  %1668 = vmatpush1.msra.mxu0 %v424
  %1669 = vmatprep.subr.mxu0 %v421
  %1670 = vmatpush1.msra.mxu0 %v420
  %1671 = vmatprep.subr.mxu0 %v417
  %1672 = vmatpush1.msra.mxu0 %v416
  %1673 = vmatprep.subr.mxu0 %v413
  %1674 = vmatpush1.msra.mxu0 %v412
  %1675 = vmatprep.subr.mxu0 %v409
  %1676 = vmatpush1.msra.mxu0 %v408
  %1677 = vmatprep.subr.mxu0 %v405
  %1678 = vmatpush1.msra.mxu0 %v404
  %1679 = vmatprep.subr.mxu0 %v401
  %1680 = vmatpush1.msra.mxu0 %v400
  %1681 = vmatprep.subr.mxu0 %v397
  %1682 = vmatpush1.msra.mxu0 %v396
  %1683 = vmatprep.subr.mxu0 %v393
  %1684 = vmatpush1.msra.mxu0 %v392
  %1685 = vmatprep.subr.mxu0 %v389
  %1686 = vmatpush1.msra.mxu0 %v388
  %1687 = vmatprep.subr.mxu0 %v385
  %1688 = vmatpush1.msra.mxu0 %v384
  %1689 = vmatprep.subr.mxu0 %v381
  %1690 = vmatpush1.msra.mxu0 %v380
  %1691 = vmatprep.subr.mxu0 0.0
  %1692 = vmatpush2.msra.mxu0 0.0
  %1693 = vmatprep.subr.mxu0 0.0
  %1694 = vmatpush2.msra.mxu0 0.0
  %1695 = vmatprep.subr.mxu0 0.0
  %1696 = vmatpush2.msra.mxu0 0.0
  %1697 = vmatprep.subr.mxu0 0.0
  %1698 = vmatpush2.msra.mxu0 0.0
  %1699 = vmatprep.subr.mxu0 0.0
  %1700 = vmatpush2.msra.mxu0 0.0
  %1701 = vmatprep.subr.mxu0 0.0
  %1702 = vmatpush2.msra.mxu0 0.0
  %1703 = vmatprep.subr.mxu0 0.0
  %1704 = vmatpush2.msra.mxu0 0.0
  %1705 = vmatprep.subr.mxu0 0.0
  %1706 = vmatpush2.msra.mxu0 0.0
  %1707 = vmatprep.subr.mxu0 0.0
  %1708 = vmatpush2.msra.mxu0 0.0
  %1709 = vmatprep.subr.mxu0 0.0
  %1710 = vmatpush2.msra.mxu0 0.0
  %1711 = vmatprep.subr.mxu0 0.0
  %1712 = vmatpush2.msra.mxu0 0.0
  %1713 = vmatprep.subr.mxu0 0.0
  %1714 = vmatpush2.msra.mxu0 0.0
  %1715 = vmatprep.subr.mxu0 0.0
  %1716 = vmatpush2.msra.mxu0 0.0
  %1717 = vmatprep.subr.mxu0 0.0
  %1718 = vmatpush2.msra.mxu0 0.0
  %1719 = vmatprep.subr.mxu0 0.0
  %1720 = vmatpush2.msra.mxu0 0.0
  %1721 = vmatprep.subr.mxu0 0.0
  %1722 = vmatpush2.msra.mxu0 0.0
  %1723 = vmatprep.mubr.f32.mxu0 0.0
  %1724 = vmatmul.mubr.f32.gmra.mxu0 %v1651
  %v1725 = vpop.f32.mrf.mxu0
  %v1726 = vadd.f32 %v1655, %v1725
  %v1727 = vpop.f32.mrf.mxu0
  %v1728 = vadd.f32 %v1656, %v1727
  %1729 = vdwg.mxu0
  %1730 = vmatprep.subr.mxu0 %v443
  %1731 = vmatpush1.msra.mxu0 %v442
  %1732 = vmatprep.subr.mxu0 %v439
  %1733 = vmatpush1.msra.mxu0 %v438
  %1734 = vmatprep.subr.mxu0 %v435
  %1735 = vmatpush1.msra.mxu0 %v434
  %1736 = vmatprep.subr.mxu0 %v431
  %1737 = vmatpush1.msra.mxu0 %v430
  %1738 = vmatprep.subr.mxu0 %v427
  %1739 = vmatpush1.msra.mxu0 %v426
  %1740 = vmatprep.subr.mxu0 %v423
  %1741 = vmatpush1.msra.mxu0 %v422
  %1742 = vmatprep.subr.mxu0 %v419
  %1743 = vmatpush1.msra.mxu0 %v418
  %1744 = vmatprep.subr.mxu0 %v415
  %1745 = vmatpush1.msra.mxu0 %v414
  %1746 = vmatprep.subr.mxu0 %v411
  %1747 = vmatpush1.msra.mxu0 %v410
  %1748 = vmatprep.subr.mxu0 %v407
  %1749 = vmatpush1.msra.mxu0 %v406
  %1750 = vmatprep.subr.mxu0 %v403
  %1751 = vmatpush1.msra.mxu0 %v402
  %1752 = vmatprep.subr.mxu0 %v399
  %1753 = vmatpush1.msra.mxu0 %v398
  %1754 = vmatprep.subr.mxu0 %v395
  %1755 = vmatpush1.msra.mxu0 %v394
  %1756 = vmatprep.subr.mxu0 %v391
  %1757 = vmatpush1.msra.mxu0 %v390
  %1758 = vmatprep.subr.mxu0 %v387
  %1759 = vmatpush1.msra.mxu0 %v386
  %1760 = vmatprep.subr.mxu0 %v383
  %1761 = vmatpush1.msra.mxu0 %v382
  %1762 = vmatprep.subr.mxu0 0.0
  %1763 = vmatpush2.msra.mxu0 0.0
  %1764 = vmatprep.subr.mxu0 0.0
  %1765 = vmatpush2.msra.mxu0 0.0
  %1766 = vmatprep.subr.mxu0 0.0
  %1767 = vmatpush2.msra.mxu0 0.0
  %1768 = vmatprep.subr.mxu0 0.0
  %1769 = vmatpush2.msra.mxu0 0.0
  %1770 = vmatprep.subr.mxu0 0.0
  %1771 = vmatpush2.msra.mxu0 0.0
  %1772 = vmatprep.subr.mxu0 0.0
  %1773 = vmatpush2.msra.mxu0 0.0
  %1774 = vmatprep.subr.mxu0 0.0
  %1775 = vmatpush2.msra.mxu0 0.0
  %1776 = vmatprep.subr.mxu0 0.0
  %1777 = vmatpush2.msra.mxu0 0.0
  %1778 = vmatprep.subr.mxu0 0.0
  %1779 = vmatpush2.msra.mxu0 0.0
  %1780 = vmatprep.subr.mxu0 0.0
  %1781 = vmatpush2.msra.mxu0 0.0
  %1782 = vmatprep.subr.mxu0 0.0
  %1783 = vmatpush2.msra.mxu0 0.0
  %1784 = vmatprep.subr.mxu0 0.0
  %1785 = vmatpush2.msra.mxu0 0.0
  %1786 = vmatprep.subr.mxu0 0.0
  %1787 = vmatpush2.msra.mxu0 0.0
  %1788 = vmatprep.subr.mxu0 0.0
  %1789 = vmatpush2.msra.mxu0 0.0
  %1790 = vmatprep.subr.mxu0 0.0
  %1791 = vmatpush2.msra.mxu0 0.0
  %1792 = vmatprep.subr.mxu0 0.0
  %1793 = vmatpush2.msra.mxu0 0.0
  %1794 = vmatprep.mubr.f32.mxu0 0.0
  %1795 = vmatmul.mubr.f32.gmra.mxu0 %v1651
  %v1796 = vpop.f32.mrf.mxu0
  %v1797 = vadd.f32 %v1657, %v1796
  %v1798 = vpop.f32.mrf.mxu0
  %v1799 = vadd.f32 %v1658, %v1798
  %1800 = vdwg.mxu0
  %v1801 = vxor.u32 %v1726, 2147483648
  %v1802 = vxor.u32 %v1728, 2147483648
  %v1803 = vxor.u32 %v1797, 2147483648
  %v1804 = vmul.f32 %v1801, 1.442695
  %v1805 = vpow.pop %v1804
  %v1806 = vmul.f32 %v1802, 1.442695
  %v1807 = vpow.pop %v1806
  %v1808 = vmul.f32 %v1803, 1.442695
  %v1809 = vpow.pop %v1808
  %v1810 = vadd.f32 %v1805, 1.0
  %v1811 = vadd.f32 %v1807, 1.0
  %v1812 = vadd.f32 %v1809, 1.0
  %v1813 = vrcp.pop %v1810
  %v1814 = vmul.f32 1.0, %v1813
  %v1815 = vrcp.pop %v1811
  %v1816 = vmul.f32 1.0, %v1815
  %v1817 = vrcp.pop %v1812
  %v1818 = vmul.f32 1.0, %v1817
  %v1819 = vtanh.pop %v1799
  %v1820 = vmul.f32 %v1816, %v1649
  %v1821 = vmul.f32 %v1814, %v1819
  %v1822 = vadd.f32 %v1820, %v1821
  %v1823 = vtanh.pop %v1822
  %v1824 = vmul.f32 %v1818, %v1823
  %v1825 = vadd.f32 %v1652, %v1824
  %v1826 = vmax.f32 %v1653, %v1824
  %v1827 = vmul.f32 %v1825, 0.125
  %1829 = vrot.lane.b32.xlu0 %v1826, 64
  %v1830 = vpop.permute.xlu0 %1829
  %1833 = vrot.lane.b32.xlu0 %v1827, 64
  %v1834 = vpop.permute.xlu0 %1833
  %v1836 = vsel %vm97, %v1827, %v1830
  %v1837 = vsel %vm97, %v1834, %v1826
  %v1838 = vld [vmem:[%s4] sm:$0xff]
  %v1839 = vld [vmem:[%s4 + $0x8] sm:$0xff]
  %v1840 = vld [vmem:[%s4 + $0x10] sm:$0xff]
  %v1841 = vld [vmem:[%s4 + $0x18] sm:$0xff]
  %v1842 = vld [vmem:[%s4 + $0x20] sm:$0xff]
  %v1843 = vld [vmem:[%s4 + $0x28] sm:$0xff]
  %v1844 = vld [vmem:[%s4 + $0x30] sm:$0xff]
  %v1845 = vld [vmem:[%s4 + $0x38] sm:$0xff]
  %v1846 = vld [vmem:[%s4 + $0x40] sm:$0xff]
  %v1847 = vld [vmem:[%s4 + $0x48] sm:$0xff]
  %v1848 = vld [vmem:[%s4 + $0x50] sm:$0xff]
  %v1849 = vld [vmem:[%s4 + $0x58] sm:$0xff]
  %v1850 = vld [vmem:[%s4 + $0x60] sm:$0xff]
  %v1851 = vld [vmem:[%s4 + $0x68] sm:$0xff]
  %v1852 = vld [vmem:[%s4 + $0x70] sm:$0xff]
  %v1853 = vld [vmem:[%s4 + $0x78] sm:$0xff]
  %v1854 = vld [vmem:[%s4 + $0x80] sm:$0xff]
  %v1855 = vld [vmem:[%s4 + $0x88] sm:$0xff]
  %v1856 = vld [vmem:[%s4 + $0x90] sm:$0xff]
  %v1857 = vld [vmem:[%s4 + $0x98] sm:$0xff]
  %v1858 = vld [vmem:[%s4 + $0xa0] sm:$0xff]
  %v1859 = vld [vmem:[%s4 + $0xa8] sm:$0xff]
  %v1860 = vld [vmem:[%s4 + $0xb0] sm:$0xff]
  %v1861 = vld [vmem:[%s4 + $0xb8] sm:$0xff]
  %v1862 = vld [vmem:[%s4 + $0xc0] sm:$0xff]
  %v1863 = vld [vmem:[%s4 + $0xc8] sm:$0xff]
  %v1864 = vld [vmem:[%s4 + $0xd0] sm:$0xff]
  %v1865 = vld [vmem:[%s4 + $0xd8] sm:$0xff]
  %v1866 = vld [vmem:[%s4 + $0xe0] sm:$0xff]
  %v1867 = vld [vmem:[%s4 + $0xe8] sm:$0xff]
  %v1868 = vld [vmem:[%s4 + $0xf0] sm:$0xff]
  %v1869 = vld [vmem:[%s4 + $0xf8] sm:$0xff]
  %v1870 = vld [vmem:[%s5] sm:$0x1]
  %v1872 = vlaneseq
  %v1873 = vshrl.u32 %v1872, 7
  %v1874 = vsub.s32 0, %v1873
  %v1875 = vrot.slane %v1870, %v1874
  %1877 = vmatprep.subr.mxu0 0.0
  %1878 = vmatpush1.msra.mxu0 %v1853
  %1879 = vmatprep.subr.mxu0 0.0
  %1880 = vmatpush1.msra.mxu0 %v1852
  %1881 = vmatprep.subr.mxu0 0.0
  %1882 = vmatpush1.msra.mxu0 %v1851
  %1883 = vmatprep.subr.mxu0 0.0
  %1884 = vmatpush1.msra.mxu0 %v1850
  %1885 = vmatprep.subr.mxu0 0.0
  %1886 = vmatpush1.msra.mxu0 %v1849
  %1887 = vmatprep.subr.mxu0 0.0
  %1888 = vmatpush1.msra.mxu0 %v1848
  %1889 = vmatprep.subr.mxu0 0.0
  %1890 = vmatpush1.msra.mxu0 %v1847
  %1891 = vmatprep.subr.mxu0 0.0
  %1892 = vmatpush1.msra.mxu0 %v1846
  %1893 = vmatprep.subr.mxu0 0.0
  %1894 = vmatpush1.msra.mxu0 %v1845
  %1895 = vmatprep.subr.mxu0 0.0
  %1896 = vmatpush1.msra.mxu0 %v1844
  %1897 = vmatprep.subr.mxu0 0.0
  %1898 = vmatpush1.msra.mxu0 %v1843
  %1899 = vmatprep.subr.mxu0 0.0
  %1900 = vmatpush1.msra.mxu0 %v1842
  %1901 = vmatprep.subr.mxu0 0.0
  %1902 = vmatpush1.msra.mxu0 %v1841
  %1903 = vmatprep.subr.mxu0 0.0
  %1904 = vmatpush1.msra.mxu0 %v1840
  %1905 = vmatprep.subr.mxu0 0.0
  %1906 = vmatpush1.msra.mxu0 %v1839
  %1907 = vmatprep.subr.mxu0 0.0
  %1908 = vmatpush1.msra.mxu0 %v1838
  %1909 = vmatprep.subr.mxu0 0.0
  %1910 = vmatpush2.msra.mxu0 %v1869
  %1911 = vmatprep.subr.mxu0 0.0
  %1912 = vmatpush2.msra.mxu0 %v1868
  %1913 = vmatprep.subr.mxu0 0.0
  %1914 = vmatpush2.msra.mxu0 %v1867
  %1915 = vmatprep.subr.mxu0 0.0
  %1916 = vmatpush2.msra.mxu0 %v1866
  %1917 = vmatprep.subr.mxu0 0.0
  %1918 = vmatpush2.msra.mxu0 %v1865
  %1919 = vmatprep.subr.mxu0 0.0
  %1920 = vmatpush2.msra.mxu0 %v1864
  %1921 = vmatprep.subr.mxu0 0.0
  %1922 = vmatpush2.msra.mxu0 %v1863
  %1923 = vmatprep.subr.mxu0 0.0
  %1924 = vmatpush2.msra.mxu0 %v1862
  %1925 = vmatprep.subr.mxu0 0.0
  %1926 = vmatpush2.msra.mxu0 %v1861
  %1927 = vmatprep.subr.mxu0 0.0
  %1928 = vmatpush2.msra.mxu0 %v1860
  %1929 = vmatprep.subr.mxu0 0.0
  %1930 = vmatpush2.msra.mxu0 %v1859
  %1931 = vmatprep.subr.mxu0 0.0
  %1932 = vmatpush2.msra.mxu0 %v1858
  %1933 = vmatprep.subr.mxu0 0.0
  %1934 = vmatpush2.msra.mxu0 %v1857
  %1935 = vmatprep.subr.mxu0 0.0
  %1936 = vmatpush2.msra.mxu0 %v1856
  %1937 = vmatprep.subr.mxu0 0.0
  %1938 = vmatpush2.msra.mxu0 %v1855
  %1939 = vmatprep.subr.mxu0 0.0
  %1940 = vmatpush2.msra.mxu0 %v1854
  %1941 = vmatprep.mubr.f32.mxu0 %v1837
  %1942 = vmatmul.mubr.f32.gmra.mxu0 %v1836
  %v1943 = vpop.f32.mrf.mxu0
  %v1944 = vadd.f32 %v1875, %v1943
  %v1945 = vpop.f32.mrf.mxu0
  %1946 = vdwg.mxu0
  %v1947 = vmax.f32 %v1944, 0.0
  %1949 = vrot.lane.b32.xlu0 %v1947, 96
  %v1950 = vpop.permute.xlu0 %1949
  %v1952 = vmul.f32 %v1947, %v1950
  %v1953 = vsub.f32 %v1947, %v1950
  %1955 = vrot.lane.b32.xlu0 %v1952, 64
  %v1956 = vpop.permute.xlu0 %1955
  %1959 = vrot.lane.b32.xlu0 %v1953, 96
  %v1960 = vpop.permute.xlu0 %1959
  %v1962 = vsel %vm97, %v1947, %v1956
  %vm1963 = vcmask 785408
  %v1964 = vsel %vm1963, %v1962, %v1960
  %v1965 = vld [vmem:[%s6] sm:$0xff]
  %v1966 = vld [vmem:[%s6 + $0x8] sm:$0xff]
  %v1967 = vld [vmem:[%s6 + $0x10] sm:$0xff]
  %v1968 = vld [vmem:[%s6 + $0x18] sm:$0xff]
  %v1969 = vld [vmem:[%s6 + $0x20] sm:$0xff]
  %v1970 = vld [vmem:[%s6 + $0x28] sm:$0xff]
  %v1971 = vld [vmem:[%s6 + $0x30] sm:$0xff]
  %v1972 = vld [vmem:[%s6 + $0x38] sm:$0xff]
  %v1973 = vld [vmem:[%s6 + $0x40] sm:$0xff]
  %v1974 = vld [vmem:[%s6 + $0x48] sm:$0xff]
  %v1975 = vld [vmem:[%s6 + $0x50] sm:$0xff]
  %v1976 = vld [vmem:[%s6 + $0x58] sm:$0xff]
  %v1977 = vld [vmem:[%s6 + $0x60] sm:$0xff]
  %v1978 = vld [vmem:[%s6 + $0x68] sm:$0xff]
  %v1979 = vld [vmem:[%s6 + $0x70] sm:$0xff]
  %v1980 = vld [vmem:[%s6 + $0x78] sm:$0xff]
  %v1981 = vld [vmem:[%s7] sm:$0x1]
  %v1983 = vlaneseq
  %v1984 = vshrl.u32 %v1983, 7
  %v1985 = vsub.s32 0, %v1984
  %v1986 = vrot.slane %v1981, %v1985
  %1988 = vmatprep.subr.mxu0 0.0
  %1989 = vmatpush1.msra.mxu0 %v1980
  %1990 = vmatprep.subr.mxu0 0.0
  %1991 = vmatpush1.msra.mxu0 %v1979
  %1992 = vmatprep.subr.mxu0 0.0
  %1993 = vmatpush1.msra.mxu0 %v1978
  %1994 = vmatprep.subr.mxu0 0.0
  %1995 = vmatpush1.msra.mxu0 %v1977
  %1996 = vmatprep.subr.mxu0 0.0
  %1997 = vmatpush1.msra.mxu0 %v1976
  %1998 = vmatprep.subr.mxu0 0.0
  %1999 = vmatpush1.msra.mxu0 %v1975
  %2000 = vmatprep.subr.mxu0 0.0
  %2001 = vmatpush1.msra.mxu0 %v1974
  %2002 = vmatprep.subr.mxu0 0.0
  %2003 = vmatpush1.msra.mxu0 %v1973
  %2004 = vmatprep.subr.mxu0 0.0
  %2005 = vmatpush1.msra.mxu0 %v1972
  %2006 = vmatprep.subr.mxu0 0.0
  %2007 = vmatpush1.msra.mxu0 %v1971
  %2008 = vmatprep.subr.mxu0 0.0
  %2009 = vmatpush1.msra.mxu0 %v1970
  %2010 = vmatprep.subr.mxu0 0.0
  %2011 = vmatpush1.msra.mxu0 %v1969
  %2012 = vmatprep.subr.mxu0 0.0
  %2013 = vmatpush1.msra.mxu0 %v1968
  %2014 = vmatprep.subr.mxu0 0.0
  %2015 = vmatpush1.msra.mxu0 %v1967
  %2016 = vmatprep.subr.mxu0 0.0
  %2017 = vmatpush1.msra.mxu0 %v1966
  %2018 = vmatprep.subr.mxu0 0.0
  %2019 = vmatpush1.msra.mxu0 %v1965
  %2020 = vmatprep.subr.mxu0 0.0
  %2021 = vmatpush2.msra.mxu0 0.0
  %2022 = vmatprep.subr.mxu0 0.0
  %2023 = vmatpush2.msra.mxu0 0.0
  %2024 = vmatprep.subr.mxu0 0.0
  %2025 = vmatpush2.msra.mxu0 0.0
  %2026 = vmatprep.subr.mxu0 0.0
  %2027 = vmatpush2.msra.mxu0 0.0
  %2028 = vmatprep.subr.mxu0 0.0
  %2029 = vmatpush2.msra.mxu0 0.0
  %2030 = vmatprep.subr.mxu0 0.0
  %2031 = vmatpush2.msra.mxu0 0.0
  %2032 = vmatprep.subr.mxu0 0.0
  %2033 = vmatpush2.msra.mxu0 0.0
  %2034 = vmatprep.subr.mxu0 0.0
  %2035 = vmatpush2.msra.mxu0 0.0
  %2036 = vmatprep.subr.mxu0 0.0
  %2037 = vmatpush2.msra.mxu0 0.0
  %2038 = vmatprep.subr.mxu0 0.0
  %2039 = vmatpush2.msra.mxu0 0.0
  %2040 = vmatprep.subr.mxu0 0.0
  %2041 = vmatpush2.msra.mxu0 0.0
  %2042 = vmatprep.subr.mxu0 0.0
  %2043 = vmatpush2.msra.mxu0 0.0
  %2044 = vmatprep.subr.mxu0 0.0
  %2045 = vmatpush2.msra.mxu0 0.0
  %2046 = vmatprep.subr.mxu0 0.0
  %2047 = vmatpush2.msra.mxu0 0.0
  %2048 = vmatprep.subr.mxu0 0.0
  %2049 = vmatpush2.msra.mxu0 0.0
  %2050 = vmatprep.subr.mxu0 0.0
  %2051 = vmatpush2.msra.mxu0 0.0
  %2052 = vmatprep.mubr.f32.mxu0 0.0
  %2053 = vmatmul.mubr.f32.gmra.mxu0 %v1964
  %v2054 = vpop.f32.mrf.mxu0
  %v2055 = vadd.f32 %v1986, %v2054
  %v2056 = vpop.f32.mrf.mxu0
  %2057 = vdwg.mxu0
  %v2058 = vmax.f32 %v2055, 0.0
  %v2059 = vld [vmem:[%s8] sm:$0xff]
  %v2060 = vld [vmem:[%s8 + $0x8] sm:$0xff]
  %v2061 = vld [vmem:[%s8 + $0x10] sm:$0xff]
  %v2062 = vld [vmem:[%s8 + $0x18] sm:$0xff]
  %v2063 = vld [vmem:[%s9] sm:$0x1]
  %v2065 = vlaneseq
  %v2066 = vshrl.u32 %v2065, 7
  %v2067 = vsub.s32 0, %v2066
  %v2068 = vrot.slane %v2063, %v2067
  %vm2070 = vcmask 261120
  %v2072 = vsel %vm2070, %v2058, 0
  %2074 = vmatprep.subr.mxu0 0.0
  %2075 = vmatpush1.msra.mxu0 0.0
  %2076 = vmatprep.subr.mxu0 0.0
  %2077 = vmatpush1.msra.mxu0 0.0
  %2078 = vmatprep.subr.mxu0 0.0
  %2079 = vmatpush1.msra.mxu0 0.0
  %2080 = vmatprep.subr.mxu0 0.0
  %2081 = vmatpush1.msra.mxu0 0.0
  %2082 = vmatprep.subr.mxu0 0.0
  %2083 = vmatpush1.msra.mxu0 0.0
  %2084 = vmatprep.subr.mxu0 0.0
  %2085 = vmatpush1.msra.mxu0 0.0
  %2086 = vmatprep.subr.mxu0 0.0
  %2087 = vmatpush1.msra.mxu0 0.0
  %2088 = vmatprep.subr.mxu0 0.0
  %2089 = vmatpush1.msra.mxu0 0.0
  %2090 = vmatprep.subr.mxu0 0.0
  %2091 = vmatpush1.msra.mxu0 0.0
  %2092 = vmatprep.subr.mxu0 0.0
  %2093 = vmatpush1.msra.mxu0 0.0
  %2094 = vmatprep.subr.mxu0 0.0
  %2095 = vmatpush1.msra.mxu0 0.0
  %2096 = vmatprep.subr.mxu0 0.0
  %2097 = vmatpush1.msra.mxu0 0.0
  %2098 = vmatprep.subr.mxu0 0.0
  %2099 = vmatpush1.msra.mxu0 %v2062
  %2100 = vmatprep.subr.mxu0 0.0
  %2101 = vmatpush1.msra.mxu0 %v2061
  %2102 = vmatprep.subr.mxu0 0.0
  %2103 = vmatpush1.msra.mxu0 %v2060
  %2104 = vmatprep.subr.mxu0 0.0
  %2105 = vmatpush1.msra.mxu0 %v2059
  %2106 = vmatprep.subr.mxu0 0.0
  %2107 = vmatpush2.msra.mxu0 0.0
  %2108 = vmatprep.subr.mxu0 0.0
  %2109 = vmatpush2.msra.mxu0 0.0
  %2110 = vmatprep.subr.mxu0 0.0
  %2111 = vmatpush2.msra.mxu0 0.0
  %2112 = vmatprep.subr.mxu0 0.0
  %2113 = vmatpush2.msra.mxu0 0.0
  %2114 = vmatprep.subr.mxu0 0.0
  %2115 = vmatpush2.msra.mxu0 0.0
  %2116 = vmatprep.subr.mxu0 0.0
  %2117 = vmatpush2.msra.mxu0 0.0
  %2118 = vmatprep.subr.mxu0 0.0
  %2119 = vmatpush2.msra.mxu0 0.0
  %2120 = vmatprep.subr.mxu0 0.0
  %2121 = vmatpush2.msra.mxu0 0.0
  %2122 = vmatprep.subr.mxu0 0.0
  %2123 = vmatpush2.msra.mxu0 0.0
  %2124 = vmatprep.subr.mxu0 0.0
  %2125 = vmatpush2.msra.mxu0 0.0
  %2126 = vmatprep.subr.mxu0 0.0
  %2127 = vmatpush2.msra.mxu0 0.0
  %2128 = vmatprep.subr.mxu0 0.0
  %2129 = vmatpush2.msra.mxu0 0.0
  %2130 = vmatprep.subr.mxu0 0.0
  %2131 = vmatpush2.msra.mxu0 0.0
  %2132 = vmatprep.subr.mxu0 0.0
  %2133 = vmatpush2.msra.mxu0 0.0
  %2134 = vmatprep.subr.mxu0 0.0
  %2135 = vmatpush2.msra.mxu0 0.0
  %2136 = vmatprep.subr.mxu0 0.0
  %2137 = vmatpush2.msra.mxu0 0.0
  %2138 = vmatprep.mubr.f32.mxu0 0.0
  %2139 = vmatmul.mubr.f32.gmra.mxu0 %v2072
  %v2140 = vpop.f32.mrf.mxu0
  %v2141 = vadd.f32 %v2068, %v2140
  %v2142 = vpop.f32.mrf.mxu0
  %2143 = vdwg.mxu0
  %2144 = vst [vmem:[%s10] sm:$0xff] %v2141
  // Predicated region
  $region42: #{bilstm_nli_forward.1} parent=0 // pred_check
    _
  $region43: #{bilstm_nli_forward.1} parent=0 // pred_check_branch
    %2146 = sbr.rel (0) target = $region45
  $region44: #{bilstm_nli_forward.1} parent=0 // pred_region
    _
  $region45: #{bilstm_nli_forward.1} parent=0 // pred_fallthru
    _
  // Predicated region
  $region46: #{bilstm_nli_forward.1} parent=0 // pred_check
    _
  $region47: #{bilstm_nli_forward.1} parent=0 // pred_check_branch
    %2148 = sbr.rel (0) target = $region49
  $region48: #{bilstm_nli_forward.1} parent=0 // pred_region
    _
  $region49: #{bilstm_nli_forward.1} parent=0 // pred_fallthru
    _

</llo_original>
